<compile_context>
chip_gen: v7x
topology: tpu7x:2x2x1
jax: 0.10.0
libtpu: 0.0.40
codegen_flags: <defaults>
</compile_context>

<pallas_src>
import jax
import jax.numpy as jnp
from jax.experimental import pallas as pl
from jax.experimental.pallas import tpu as pltpu


def _round_up(x, m):
    return (x + m - 1) // m * m


def _usable_vmem_bytes():
    """Per-generation usable VMEM (~80% of physical); 64 MiB-safe fallback (v7x)."""
    try:
        cap = int(pltpu.get_tpu_info().vmem_capacity_bytes)
    except Exception:
        cap = 64 * 1024 * 1024
    return max(32 * 1024 * 1024, int(cap * 0.8))


# ----------------------------------------------------------------------------
# Fused gather + MLP predictor kernel (transposed, batch-on-lanes formulation)
#   refs: d1_idx, d2_idx, table_t, w1aT, w1bT, b1, [wT_i, b_i ...], w_col, b_last, out
# ----------------------------------------------------------------------------
def _make_mlp_kernel(num_mid):
    def kernel(d1_ref, d2_ref, table_ref, *rest):
        o_ref = rest[-1]
        p = rest[:-1]
        _, ndp = table_ref.shape
        tm = o_ref.shape[-1]

        # In-kernel pair gather: one-hot MXU matmul against the VMEM-resident
        # transposed drug table (x_t[:, c] = table_t[:, idx[c]]).  Exact (0/1 weights).
        drug_ids = jax.lax.broadcasted_iota(jnp.int32, (ndp, tm), 0)
        table = table_ref[...]                                    # (Fp, ndp) bf16
        oh1 = (drug_ids == d1_ref[...]).astype(table.dtype)       # (ndp, tm)
        oh2 = (drug_ids == d2_ref[...]).astype(table.dtype)
        x1t = jnp.dot(table, oh1,
                      preferred_element_type=jnp.float32).astype(table.dtype)
        x2t = jnp.dot(table, oh2,
                      preferred_element_type=jnp.float32).astype(table.dtype)

        # Layer 0: concat(x1, x2) @ W1  ==  W1a^T @ x1^T + W1b^T @ x2^T (split W1,
        # transposed form -> no concat, lane-dense batch axis).
        w1a, w1b, b1 = p[0], p[1], p[2]
        h = (jnp.dot(w1a[...], x1t, preferred_element_type=jnp.float32)
             + jnp.dot(w1b[...], x2t, preferred_element_type=jnp.float32)
             + b1[...])
        h = jnp.maximum(h, 0.0)

        # Hidden layers (MXU bf16 with f32 accumulation; bias/ReLU stay f32 on VPU).
        k = 3
        for _ in range(num_mid):
            w, b = p[k], p[k + 1]
            k += 2
            h = jnp.dot(w[...], h.astype(w.dtype),
                        preferred_element_type=jnp.float32) + b[...]
            h = jnp.maximum(h, 0.0)

        # Final out_dim == 1 layer on the VPU/XLU (sublane reduce) -> lane-dense (1, tm).
        w_col, b_last = p[k], p[k + 1]             # (Hlast_p, 1) f32, (1, 1) f32
        logit = jnp.sum(h * w_col[...], axis=0, keepdims=True) + b_last[...]
        o_ref[...] = logit.astype(o_ref.dtype)

    return kernel


def _build_predictor_call(kernel, out_shape, grid, tm, table_t, params,
                          compiler_params, cost, single_buffer):
    if single_buffer:
        def res_spec(arr):
            return pl.BlockSpec(arr.shape, lambda i: (0, 0),
                                pipeline_mode=pl.Buffered(1))
    else:
        def res_spec(arr):
            return pl.BlockSpec(arr.shape, lambda i: (0, 0))

    idx_spec = pl.BlockSpec((1, tm), lambda i: (0, i))
    out_spec = pl.BlockSpec((1, tm), lambda i: (0, i))
    in_specs = [idx_spec, idx_spec, res_spec(table_t)] + [res_spec(p) for p in params]
    return pl.pallas_call(
        kernel,
        out_shape=out_shape,
        grid=grid,
        in_specs=in_specs,
        out_specs=out_spec,
        compiler_params=compiler_params,
        cost_estimate=cost,
    )


def mlp_predictor(table_t, d1_idx, d2_idx, params, *, num_mid, tile_m=1024):
    """table_t: (feat_pad, n_drugs_pad) bf16 transposed drug table (VMEM-resident).

    d1_idx / d2_idx: (batch,) int32 drug indices of each pair.
    params: (w1aT, w1bT, b1, [wT_i, b_i ...], w_col, b_last), transposed / padded.
    Returns (batch, 1) f32 synergy scores.
    """
    batch = int(d1_idx.shape[0])
    feat_pad, ndp = table_t.shape

    # ---- batch tile selection (batch lives on the lane axis) ----
    padded128 = _round_up(batch, 128)
    tm = min(_round_up(tile_m, 128), padded128)
    # v7x megacore: prefer >= 2 grid steps when the batch is big enough to split.
    if padded128 // tm < 2 and padded128 >= 256:
        tm = _round_up(padded128 // 2, 128)

    usable = _usable_vmem_bytes()
    resident = 2 * (int(table_t.size) * table_t.dtype.itemsize
                    + sum(int(p.size) * p.dtype.itemsize for p in params))
    max_h = max([feat_pad, ndp] + [p.shape[0] for p in params])

    def _est(tm_):
        io = 6 * tm_ * 4                                   # idx in + out, double-buffered
        act = tm_ * (2 * ndp * 6 + 2 * feat_pad * 4 + 6 * max_h * 4)
        return resident + io + act

    while _est(tm) > usable and tm > 128:
        tm = max(128, (tm // 2) // 128 * 128)

    padded = _round_up(batch, tm)
    num_tiles = padded // tm
    pad = padded - batch

    d1 = jnp.pad(jnp.asarray(d1_idx, jnp.int32), (0, pad)).reshape(1, padded)
    d2 = jnp.pad(jnp.asarray(d2_idx, jnp.int32), (0, pad)).reshape(1, padded)

    vmem_limit = int(min(usable, max(32 * 1024 * 1024, _est(tm) + (8 << 20))))
    cparams = pltpu.CompilerParams(
        dimension_semantics=("parallel",),
        vmem_limit_bytes=vmem_limit)

    # Advisory cost estimate so XLA schedules the surrounding ops sensibly.
    flops_per_col = 2 * 2 * feat_pad * ndp + 2 * 2 * params[0].shape[0] * feat_pad
    k = 3
    for _ in range(num_mid):
        flops_per_col += 2 * params[k].shape[0] * params[k].shape[1]
        k += 2
    flops_per_col += 2 * params[k].shape[0]
    bytes_accessed = (3 * padded * 4
                      + int(table_t.size) * table_t.dtype.itemsize
                      + sum(int(p.size) * p.dtype.itemsize for p in params))
    cost = pl.CostEstimate(flops=padded * flops_per_col, transcendentals=0,
                           bytes_accessed=bytes_accessed)

    kernel = _make_mlp_kernel(num_mid)
    out_shape = jax.ShapeDtypeStruct((1, padded), jnp.float32)

    try:
        call = _build_predictor_call(kernel, out_shape, (num_tiles,), tm, table_t,
                                     params, cparams, cost, single_buffer=True)
        out = call(d1, d2, table_t, *params)
    except Exception:
        # Fallback if pl.Buffered(1) is rejected by this jax/libtpu build.
        call = _build_predictor_call(kernel, out_shape, (num_tiles,), tm, table_t,
                                     params, cparams, cost, single_buffer=False)
        out = call(d1, d2, table_t, *params)

    return out.reshape(-1)[:batch][:, None]


# ----------------------------------------------------------------------------
# MSELoss kernel (mean reduction), lane-dense (rows, 8, 128) blocks
# ----------------------------------------------------------------------------
def _make_mse_kernel(inv_n):
    def kernel(pred_ref, tgt_ref, o_ref, acc_ref):
        i = pl.program_id(0)

        @pl.when(i == 0)
        def _():
            acc_ref[...] = jnp.zeros_like(acc_ref)

        d = pred_ref[...] - tgt_ref[...]              # (tr, 8, 128) f32
        acc_ref[...] += jnp.sum(d * d, axis=0)        # pure VPU adds -> (8, 128)

        @pl.when(i == pl.num_programs(0) - 1)
        def _():
            # Single cross-lane/sublane reduce at the end.
            o_ref[...] = jnp.sum(acc_ref[...], keepdims=True) * inv_n

    return kernel


def mse_loss(pred, target, *, tile_rows=32):
    n = int(pred.shape[0])
    pred = pred.reshape(-1).astype(jnp.float32)
    target = target.reshape(-1).astype(jnp.float32)

    rows = pl.cdiv(n, 1024)               # number of (8,128) blocks
    tr = min(tile_rows, rows)
    padded = _round_up(n, tr * 1024)
    # Zero-padded tail elements cancel exactly (pred == target == 0).
    pred = jnp.pad(pred, (0, padded - n)).reshape(-1, 8, 128)
    target = jnp.pad(target, (0, padded - n)).reshape(-1, 8, 128)
    grid = (pred.shape[0] // tr,)

    out = pl.pallas_call(
        _make_mse_kernel(1.0 / float(n)),            # divisor = true batch size
        out_shape=jax.ShapeDtypeStruct((1, 1), jnp.float32),
        grid=grid,
        in_specs=[pl.BlockSpec((tr, 8, 128), lambda i: (i, 0, 0)),
                  pl.BlockSpec((tr, 8, 128), lambda i: (i, 0, 0))],
        out_specs=pl.BlockSpec((1, 1), lambda i: (0, 0)),
        scratch_shapes=[pltpu.VMEM((8, 128), jnp.float32)],
        compiler_params=pltpu.CompilerParams(dimension_semantics=("arbitrary",)),
    )(pred, target)
    return out[0, 0]


# ----------------------------------------------------------------------------
# MyBaseline equivalent
# ----------------------------------------------------------------------------
class MyBaselinePallas:
    """Concat-MLP drug-pair synergy predictor with MSE loss (MyBaseline spec)."""

    def __init__(self, feat_dim, predictor_layers, key, *, param_dtype=jnp.bfloat16):
        assert predictor_layers[-1] == 1
        assert len(predictor_layers) >= 2, "need at least one hidden layer"
        self.feat_dim = feat_dim
        self.param_dtype = param_dtype
        self.feat_pad = _round_up(feat_dim, 128)

        hidden = list(predictor_layers[:-1])
        hidden_pad = [_round_up(h, 128) for h in hidden]
        self.num_mid = len(hidden) - 1

        params = []
        # Layer 0: weight split into drug-a / drug-b halves, stored transposed+padded.
        key, k0 = jax.random.split(key)
        w0 = jax.random.normal(k0, (2 * feat_dim, hidden[0]), jnp.float32) \
            * (2 * feat_dim) ** -0.5
        w1a = jnp.zeros((hidden_pad[0], self.feat_pad), jnp.float32)
        w1a = w1a.at[:hidden[0], :feat_dim].set(w0[:feat_dim].T)
        w1b = jnp.zeros((hidden_pad[0], self.feat_pad), jnp.float32)
        w1b = w1b.at[:hidden[0], :feat_dim].set(w0[feat_dim:].T)
        params += [w1a.astype(param_dtype), w1b.astype(param_dtype),
                   jnp.zeros((hidden_pad[0], 1), jnp.float32)]
        # Middle hidden layers (transposed, zero-padded -> exact math).
        for li in range(self.num_mid):
            fan_in, fan_out = hidden[li], hidden[li + 1]
            key, kw = jax.random.split(key)
            w = jax.random.normal(kw, (fan_in, fan_out), jnp.float32) * fan_in ** -0.5
            wt = jnp.zeros((hidden_pad[li + 1], hidden_pad[li]), jnp.float32)
            wt = wt.at[:fan_out, :fan_in].set(w.T)
            params += [wt.astype(param_dtype),
                       jnp.zeros((hidden_pad[li + 1], 1), jnp.float32)]
        # Final (out_dim == 1) layer stored as an f32 column for the VPU/XLU path.
        key, kw = jax.random.split(key)
        wl = jax.random.normal(kw, (hidden[-1], 1), jnp.float32) * hidden[-1] ** -0.5
        w_col = jnp.zeros((hidden_pad[-1], 1), jnp.float32).at[:hidden[-1], :].set(wl)
        params += [w_col, jnp.zeros((1, 1), jnp.float32)]
        self.params = tuple(params)

        self._table_src = None
        self._table = None

    def _prepare_table(self, data):
        """Pad + transpose + bf16-cast the drug feature table once (cached)."""
        if self._table is None or self._table_src is not data:
            n_drugs, feat = data.shape
            assert feat == self.feat_dim
            ndp = _round_up(n_drugs, 128)
            tab = jnp.zeros((self.feat_pad, ndp), self.param_dtype)
            tab = tab.at[:feat, :n_drugs].set(data.T.astype(self.param_dtype))
            self._table_src = data
            self._table = tab
        return self._table

    def forward(self, data, drug_drug_batch):
        """data: [n_drugs, feat_dim]; drug_drug_batch: (d1_idx, d2_idx, scores)."""
        d1_idx, d2_idx, _ = drug_drug_batch
        table_t = self._prepare_table(data)
        return mlp_predictor(table_t,
                             jnp.asarray(d1_idx, jnp.int32),
                             jnp.asarray(d2_idx, jnp.int32),
                             self.params, num_mid=self.num_mid)

    def loss(self, output, drug_drug_batch):
        ground_truth_scores = drug_drug_batch[2][:, None]
        return mse_loss(output, ground_truth_scores)


# ----------------------------------------------------------------------------
# Plain-JAX reference of the same (transposed, padded) math for validation
# ----------------------------------------------------------------------------
def _reference_forward(model, data, drug_drug_batch):
    d1, d2, _ = drug_drug_batch
    tab = model._prepare_table(data)                    # (Fp, ndp) bf16
    p = model.params
    x1 = tab[:, d1]                                     # (Fp, B)
    x2 = tab[:, d2]
    h = (jnp.dot(p[0], x1, preferred_element_type=jnp.float32)
         + jnp.dot(p[1], x2, preferred_element_type=jnp.float32) + p[2])
    h = jnp.maximum(h, 0.0)
    k = 3
    for _ in range(model.num_mid):
        w, b = p[k], p[k + 1]
        k += 2
        h = jnp.dot(w, h.astype(w.dtype), preferred_element_type=jnp.float32) + b
        h = jnp.maximum(h, 0.0)
    logit = jnp.sum(h * p[k], axis=0) + p[k + 1][0, 0]
    return logit[:, None]


if __name__ == "__main__":
    key = jax.random.PRNGKey(0)
    k_feat, k_idx1, k_idx2, k_score, k_params = jax.random.split(key, 5)

    n_drugs = 6
    feat_dim = 16
    batch = 8
    predictor_layers = [32, 16, 1]   # config['predictor_layers'], last == 1

    data = jax.random.normal(k_feat, (n_drugs, feat_dim), jnp.float32)
    d1 = jax.random.randint(k_idx1, (batch,), 0, n_drugs, jnp.int32)
    d2 = jax.random.randint(k_idx2, (batch,), 0, n_drugs, jnp.int32)
    scores = jax.random.normal(k_score, (batch,), jnp.float32)
    drug_drug_batch = (d1, d2, scores)

    # TODO(synk): the original config['predictor'] factory / PyG data object is
    # abstracted to a dense [n_drugs, feat_dim] drug-feature matrix here.
    model = MyBaselinePallas(feat_dim, predictor_layers, k_params)

    logits = model.forward(data, drug_drug_batch)          # [batch, 1]
    loss = model.loss(logits, drug_drug_batch)             # scalar (MSE)

    jax.block_until_ready(logits)
    jax.block_until_ready(loss)

    assert logits.shape == (batch, 1)
    assert loss.shape == ()

    # Correctness check against a plain-JAX reference of the same math.
    ref = _reference_forward(model, data, drug_drug_batch)
    ref_loss = jnp.mean((ref - scores[:, None]) ** 2)
    direct_loss = jnp.mean((logits - scores[:, None]) ** 2)

    assert jnp.allclose(logits, ref, atol=5e-2, rtol=5e-2)
    assert jnp.allclose(loss, direct_loss, atol=1e-4, rtol=1e-4)
    assert jnp.allclose(loss, ref_loss, atol=5e-2, rtol=5e-2)

    print("KERNEL_OK")
</pallas_src>

<mosaic_0001>
module attributes {stable_mosaic.version = 11 : i64} {
  func.func @kernel(%arg0: i32, %arg1: memref<1x128xi32, #tpu.memory_space<vmem>>, %arg2: memref<1x128xi32, #tpu.memory_space<vmem>>, %arg3: memref<128x128xbf16, #tpu.memory_space<vmem>>, %arg4: memref<128x128xbf16, #tpu.memory_space<vmem>>, %arg5: memref<128x128xbf16, #tpu.memory_space<vmem>>, %arg6: memref<128x1xf32, #tpu.memory_space<vmem>>, %arg7: memref<128x128xbf16, #tpu.memory_space<vmem>>, %arg8: memref<128x1xf32, #tpu.memory_space<vmem>>, %arg9: memref<128x1xf32, #tpu.memory_space<vmem>>, %arg10: memref<1x1xf32, #tpu.memory_space<vmem>>, %arg11: memref<1x128xf32, #tpu.memory_space<vmem>>) attributes {dimension_semantics = [#tpu.dimension_semantics<parallel>], iteration_bounds = array<i64: 1>, scalar_prefetch = 0 : i64, scratch_operands = 0 : i64, tpu.core_type = #tpu.core_type<tc>, window_params = [{transform_indices = @transform_0, window_bounds = array<i64: 1, 128>}, {transform_indices = @transform_1, window_bounds = array<i64: 1, 128>}, {pipeline_mode = #tpu.pipeline_mode<synchronous>, transform_indices = @transform_2, window_bounds = array<i64: 128, 128>}, {pipeline_mode = #tpu.pipeline_mode<synchronous>, transform_indices = @transform_3, window_bounds = array<i64: 128, 128>}, {pipeline_mode = #tpu.pipeline_mode<synchronous>, transform_indices = @transform_4, window_bounds = array<i64: 128, 128>}, {pipeline_mode = #tpu.pipeline_mode<synchronous>, transform_indices = @transform_5, window_bounds = array<i64: 128, 1>}, {pipeline_mode = #tpu.pipeline_mode<synchronous>, transform_indices = @transform_6, window_bounds = array<i64: 128, 128>}, {pipeline_mode = #tpu.pipeline_mode<synchronous>, transform_indices = @transform_7, window_bounds = array<i64: 128, 1>}, {pipeline_mode = #tpu.pipeline_mode<synchronous>, transform_indices = @transform_8, window_bounds = array<i64: 128, 1>}, {pipeline_mode = #tpu.pipeline_mode<synchronous>, transform_indices = @transform_9, window_bounds = array<i64: 1, 1>}, {transform_indices = @transform_10, window_bounds = array<i64: 1, 128>}]} {
    %0 = tpu.iota {dimensions = array<i32: 0>} : vector<128x128xi32>
    %c0 = arith.constant 0 : index
    %c0_0 = arith.constant 0 : index
    %1 = vector.load %arg3[%c0, %c0_0] : memref<128x128xbf16, #tpu.memory_space<vmem>>, vector<128x128xbf16>
    %c0_1 = arith.constant 0 : index
    %c0_2 = arith.constant 0 : index
    %2 = vector.load %arg1[%c0_1, %c0_2] : memref<1x128xi32, #tpu.memory_space<vmem>>, vector<1x128xi32>
    %3 = vector.broadcast %2 : vector<1x128xi32> to vector<128x128xi32>
    %4 = arith.cmpi eq, %0, %3 : vector<128x128xi32>
    %5 = arith.extui %4 : vector<128x128xi1> to vector<128x128xi32>
    %6 = arith.sitofp %5 : vector<128x128xi32> to vector<128x128xf32>
    %7 = arith.truncf %6 : vector<128x128xf32> to vector<128x128xbf16>
    %c0_3 = arith.constant 0 : index
    %c0_4 = arith.constant 0 : index
    %8 = vector.load %arg2[%c0_3, %c0_4] : memref<1x128xi32, #tpu.memory_space<vmem>>, vector<1x128xi32>
    %9 = vector.broadcast %8 : vector<1x128xi32> to vector<128x128xi32>
    %10 = arith.cmpi eq, %0, %9 : vector<128x128xi32>
    %11 = arith.extui %10 : vector<128x128xi1> to vector<128x128xi32>
    %12 = arith.sitofp %11 : vector<128x128xi32> to vector<128x128xf32>
    %13 = arith.truncf %12 : vector<128x128xf32> to vector<128x128xbf16>
    %cst = arith.constant dense<0.000000e+00> : vector<128x128xf32>
    %14 = tpu.matmul %1, %7, %cst {dimension_numbers = #tpu.dot_dimension_numbers<[1], [0], [0], [1], [0, 0, 1, 1], [], []>} : vector<128x128xbf16>, vector<128x128xbf16>, vector<128x128xf32> -> vector<128x128xf32>
    %15 = arith.truncf %14 : vector<128x128xf32> to vector<128x128xbf16>
    %cst_5 = arith.constant dense<0.000000e+00> : vector<128x128xf32>
    %16 = tpu.matmul %1, %13, %cst_5 {dimension_numbers = #tpu.dot_dimension_numbers<[1], [0], [0], [1], [0, 0, 1, 1], [], []>} : vector<128x128xbf16>, vector<128x128xbf16>, vector<128x128xf32> -> vector<128x128xf32>
    %17 = arith.truncf %16 : vector<128x128xf32> to vector<128x128xbf16>
    %c0_6 = arith.constant 0 : index
    %c0_7 = arith.constant 0 : index
    %18 = vector.load %arg4[%c0_6, %c0_7] : memref<128x128xbf16, #tpu.memory_space<vmem>>, vector<128x128xbf16>
    %cst_8 = arith.constant dense<0.000000e+00> : vector<128x128xf32>
    %19 = tpu.matmul %18, %15, %cst_8 {dimension_numbers = #tpu.dot_dimension_numbers<[1], [0], [0], [1], [0, 0, 1, 1], [], []>} : vector<128x128xbf16>, vector<128x128xbf16>, vector<128x128xf32> -> vector<128x128xf32>
    %c0_9 = arith.constant 0 : index
    %c0_10 = arith.constant 0 : index
    %20 = vector.load %arg5[%c0_9, %c0_10] : memref<128x128xbf16, #tpu.memory_space<vmem>>, vector<128x128xbf16>
    %cst_11 = arith.constant dense<0.000000e+00> : vector<128x128xf32>
    %21 = tpu.matmul %20, %17, %cst_11 {dimension_numbers = #tpu.dot_dimension_numbers<[1], [0], [0], [1], [0, 0, 1, 1], [], []>} : vector<128x128xbf16>, vector<128x128xbf16>, vector<128x128xf32> -> vector<128x128xf32>
    %22 = arith.addf %19, %21 : vector<128x128xf32>
    %c0_12 = arith.constant 0 : index
    %c0_13 = arith.constant 0 : index
    %23 = vector.load %arg6[%c0_12, %c0_13] : memref<128x1xf32, #tpu.memory_space<vmem>>, vector<128x1xf32>
    %24 = vector.broadcast %23 : vector<128x1xf32> to vector<128x128xf32>
    %25 = arith.addf %22, %24 : vector<128x128xf32>
    %cst_14 = arith.constant 0.000000e+00 : f32
    %26 = vector.broadcast %cst_14 : f32 to vector<128x128xf32>
    %27 = arith.maximumf %25, %26 : vector<128x128xf32>
    %c0_15 = arith.constant 0 : index
    %c0_16 = arith.constant 0 : index
    %28 = vector.load %arg7[%c0_15, %c0_16] : memref<128x128xbf16, #tpu.memory_space<vmem>>, vector<128x128xbf16>
    %29 = arith.truncf %27 : vector<128x128xf32> to vector<128x128xbf16>
    %cst_17 = arith.constant dense<0.000000e+00> : vector<128x128xf32>
    %30 = tpu.matmul %28, %29, %cst_17 {dimension_numbers = #tpu.dot_dimension_numbers<[1], [0], [0], [1], [0, 0, 1, 1], [], []>} : vector<128x128xbf16>, vector<128x128xbf16>, vector<128x128xf32> -> vector<128x128xf32>
    %c0_18 = arith.constant 0 : index
    %c0_19 = arith.constant 0 : index
    %31 = vector.load %arg8[%c0_18, %c0_19] : memref<128x1xf32, #tpu.memory_space<vmem>>, vector<128x1xf32>
    %32 = vector.broadcast %31 : vector<128x1xf32> to vector<128x128xf32>
    %33 = arith.addf %30, %32 : vector<128x128xf32>
    %cst_20 = arith.constant 0.000000e+00 : f32
    %34 = vector.broadcast %cst_20 : f32 to vector<128x128xf32>
    %35 = arith.maximumf %33, %34 : vector<128x128xf32>
    %c0_21 = arith.constant 0 : index
    %c0_22 = arith.constant 0 : index
    %36 = vector.load %arg9[%c0_21, %c0_22] : memref<128x1xf32, #tpu.memory_space<vmem>>, vector<128x1xf32>
    %37 = vector.broadcast %36 : vector<128x1xf32> to vector<128x128xf32>
    %38 = arith.mulf %35, %37 : vector<128x128xf32>
    %cst_23 = arith.constant dense<0.000000e+00> : vector<128xf32>
    %39 = vector.multi_reduction <add>, %38, %cst_23 [0] : vector<128x128xf32> to vector<128xf32>
    %40 = vector.shape_cast %39 : vector<128xf32> to vector<1x128xf32>
    %c0_24 = arith.constant 0 : index
    %c0_25 = arith.constant 0 : index
    %41 = vector.load %arg10[%c0_24, %c0_25] : memref<1x1xf32, #tpu.memory_space<vmem>>, vector<1x1xf32>
    %42 = vector.broadcast %41 : vector<1x1xf32> to vector<1x128xf32>
    %43 = arith.addf %40, %42 : vector<1x128xf32>
    %c0_26 = arith.constant 0 : index
    %c0_27 = arith.constant 0 : index
    %44 = vector.load %arg11[%c0_26, %c0_27] : memref<1x128xf32, #tpu.memory_space<vmem>>, vector<1x128xf32>
    tpu.vector_store %arg11[%c0_26, %c0_27], %43 {strides = array<i32>} : memref<1x128xf32, #tpu.memory_space<vmem>>, vector<1x128xf32>,
    return
  }
  func.func @transform_0(%arg0: i32) -> (i32, i32) {
    %c0_i32 = arith.constant 0 : i32
    %c0_i32_0 = arith.constant 0 : i32
    return %c0_i32, %arg0 : i32, i32
  }
  func.func @transform_1(%arg0: i32) -> (i32, i32) {
    %c0_i32 = arith.constant 0 : i32
    %c0_i32_0 = arith.constant 0 : i32
    return %c0_i32, %arg0 : i32, i32
  }
  func.func @transform_2(%arg0: i32) -> (i32, i32) {
    %c0_i32 = arith.constant 0 : i32
    %c0_i32_0 = arith.constant 0 : i32
    %c0_i32_1 = arith.constant 0 : i32
    return %c0_i32, %c0_i32_0 : i32, i32
  }
  func.func @transform_3(%arg0: i32) -> (i32, i32) {
    %c0_i32 = arith.constant 0 : i32
    %c0_i32_0 = arith.constant 0 : i32
    %c0_i32_1 = arith.constant 0 : i32
    return %c0_i32, %c0_i32_0 : i32, i32
  }
  func.func @transform_4(%arg0: i32) -> (i32, i32) {
    %c0_i32 = arith.constant 0 : i32
    %c0_i32_0 = arith.constant 0 : i32
    %c0_i32_1 = arith.constant 0 : i32
    return %c0_i32, %c0_i32_0 : i32, i32
  }
  func.func @transform_5(%arg0: i32) -> (i32, i32) {
    %c0_i32 = arith.constant 0 : i32
    %c0_i32_0 = arith.constant 0 : i32
    %c0_i32_1 = arith.constant 0 : i32
    return %c0_i32, %c0_i32_0 : i32, i32
  }
  func.func @transform_6(%arg0: i32) -> (i32, i32) {
    %c0_i32 = arith.constant 0 : i32
    %c0_i32_0 = arith.constant 0 : i32
    %c0_i32_1 = arith.constant 0 : i32
    return %c0_i32, %c0_i32_0 : i32, i32
  }
  func.func @transform_7(%arg0: i32) -> (i32, i32) {
    %c0_i32 = arith.constant 0 : i32
    %c0_i32_0 = arith.constant 0 : i32
    %c0_i32_1 = arith.constant 0 : i32
    return %c0_i32, %c0_i32_0 : i32, i32
  }
  func.func @transform_8(%arg0: i32) -> (i32, i32) {
    %c0_i32 = arith.constant 0 : i32
    %c0_i32_0 = arith.constant 0 : i32
    %c0_i32_1 = arith.constant 0 : i32
    return %c0_i32, %c0_i32_0 : i32, i32
  }
  func.func @transform_9(%arg0: i32) -> (i32, i32) {
    %c0_i32 = arith.constant 0 : i32
    %c0_i32_0 = arith.constant 0 : i32
    %c0_i32_1 = arith.constant 0 : i32
    return %c0_i32, %c0_i32_0 : i32, i32
  }
  func.func @transform_10(%arg0: i32) -> (i32, i32) {
    %c0_i32 = arith.constant 0 : i32
    %c0_i32_0 = arith.constant 0 : i32
    return %c0_i32, %arg0 : i32, i32
  }
}

module attributes {stable_mosaic.version = 11 : i64} {
  func.func @kernel(%arg0: i32, %arg1: memref<1x128xi32, #tpu.memory_space<vmem>>, %arg2: memref<1x128xi32, #tpu.memory_space<vmem>>, %arg3: memref<128x128xbf16, #tpu.memory_space<vmem>>, %arg4: memref<128x128xbf16, #tpu.memory_space<vmem>>, %arg5: memref<128x128xbf16, #tpu.memory_space<vmem>>, %arg6: memref<128x1xf32, #tpu.memory_space<vmem>>, %arg7: memref<128x128xbf16, #tpu.memory_space<vmem>>, %arg8: memref<128x1xf32, #tpu.memory_space<vmem>>, %arg9: memref<128x1xf32, #tpu.memory_space<vmem>>, %arg10: memref<1x1xf32, #tpu.memory_space<vmem>>, %arg11: memref<1x128xf32, #tpu.memory_space<vmem>>) attributes {dimension_semantics = [#tpu.dimension_semantics<parallel>], iteration_bounds = array<i64: 1>, scalar_prefetch = 0 : i64, scratch_operands = 0 : i64, tpu.core_type = #tpu.core_type<tc>, window_params = [{transform_indices = @transform_0, window_bounds = array<i64: 1, 128>}, {transform_indices = @transform_1, window_bounds = array<i64: 1, 128>}, {pipeline_mode = #tpu.pipeline_mode<synchronous>, transform_indices = @transform_2, window_bounds = array<i64: 128, 128>}, {pipeline_mode = #tpu.pipeline_mode<synchronous>, transform_indices = @transform_3, window_bounds = array<i64: 128, 128>}, {pipeline_mode = #tpu.pipeline_mode<synchronous>, transform_indices = @transform_4, window_bounds = array<i64: 128, 128>}, {pipeline_mode = #tpu.pipeline_mode<synchronous>, transform_indices = @transform_5, window_bounds = array<i64: 128, 1>}, {pipeline_mode = #tpu.pipeline_mode<synchronous>, transform_indices = @transform_6, window_bounds = array<i64: 128, 128>}, {pipeline_mode = #tpu.pipeline_mode<synchronous>, transform_indices = @transform_7, window_bounds = array<i64: 128, 1>}, {pipeline_mode = #tpu.pipeline_mode<synchronous>, transform_indices = @transform_8, window_bounds = array<i64: 128, 1>}, {pipeline_mode = #tpu.pipeline_mode<synchronous>, transform_indices = @transform_9, window_bounds = array<i64: 1, 1>}, {transform_indices = @transform_10, window_bounds = array<i64: 1, 128>}]} {
    %0 = tpu.iota {dimensions = array<i32: 0>} : vector<128x128xi32>
    %c0 = arith.constant 0 : index
    %c0_0 = arith.constant 0 : index
    %1 = vector.load %arg3[%c0, %c0_0] : memref<128x128xbf16, #tpu.memory_space<vmem>>, vector<128x128xbf16>
    %c0_1 = arith.constant 0 : index
    %c0_2 = arith.constant 0 : index
    %2 = vector.load %arg1[%c0_1, %c0_2] : memref<1x128xi32, #tpu.memory_space<vmem>>, vector<1x128xi32>
    %3 = vector.broadcast %2 : vector<1x128xi32> to vector<128x128xi32>
    %4 = arith.cmpi eq, %0, %3 : vector<128x128xi32>
    %5 = arith.extui %4 : vector<128x128xi1> to vector<128x128xi32>
    %6 = arith.sitofp %5 : vector<128x128xi32> to vector<128x128xf32>
    %7 = arith.truncf %6 : vector<128x128xf32> to vector<128x128xbf16>
    %c0_3 = arith.constant 0 : index
    %c0_4 = arith.constant 0 : index
    %8 = vector.load %arg2[%c0_3, %c0_4] : memref<1x128xi32, #tpu.memory_space<vmem>>, vector<1x128xi32>
    %9 = vector.broadcast %8 : vector<1x128xi32> to vector<128x128xi32>
    %10 = arith.cmpi eq, %0, %9 : vector<128x128xi32>
    %11 = arith.extui %10 : vector<128x128xi1> to vector<128x128xi32>
    %12 = arith.sitofp %11 : vector<128x128xi32> to vector<128x128xf32>
    %13 = arith.truncf %12 : vector<128x128xf32> to vector<128x128xbf16>
    %cst = arith.constant dense<0.000000e+00> : vector<128x128xf32>
    %14 = tpu.matmul %1, %7, %cst {dimension_numbers = #tpu.dot_dimension_numbers<[1], [0], [0], [1], [0, 0, 1, 1], [], []>} : vector<128x128xbf16>, vector<128x128xbf16>, vector<128x128xf32> -> vector<128x128xf32>
    %15 = arith.truncf %14 : vector<128x128xf32> to vector<128x128xbf16>
    %cst_5 = arith.constant dense<0.000000e+00> : vector<128x128xf32>
    %16 = tpu.matmul %1, %13, %cst_5 {dimension_numbers = #tpu.dot_dimension_numbers<[1], [0], [0], [1], [0, 0, 1, 1], [], []>} : vector<128x128xbf16>, vector<128x128xbf16>, vector<128x128xf32> -> vector<128x128xf32>
    %17 = arith.truncf %16 : vector<128x128xf32> to vector<128x128xbf16>
    %c0_6 = arith.constant 0 : index
    %c0_7 = arith.constant 0 : index
    %18 = vector.load %arg4[%c0_6, %c0_7] : memref<128x128xbf16, #tpu.memory_space<vmem>>, vector<128x128xbf16>
    %cst_8 = arith.constant dense<0.000000e+00> : vector<128x128xf32>
    %19 = tpu.matmul %18, %15, %cst_8 {dimension_numbers = #tpu.dot_dimension_numbers<[1], [0], [0], [1], [0, 0, 1, 1], [], []>} : vector<128x128xbf16>, vector<128x128xbf16>, vector<128x128xf32> -> vector<128x128xf32>
    %c0_9 = arith.constant 0 : index
    %c0_10 = arith.constant 0 : index
    %20 = vector.load %arg5[%c0_9, %c0_10] : memref<128x128xbf16, #tpu.memory_space<vmem>>, vector<128x128xbf16>
    %cst_11 = arith.constant dense<0.000000e+00> : vector<128x128xf32>
    %21 = tpu.matmul %20, %17, %cst_11 {dimension_numbers = #tpu.dot_dimension_numbers<[1], [0], [0], [1], [0, 0, 1, 1], [], []>} : vector<128x128xbf16>, vector<128x128xbf16>, vector<128x128xf32> -> vector<128x128xf32>
    %22 = arith.addf %19, %21 : vector<128x128xf32>
    %c0_12 = arith.constant 0 : index
    %c0_13 = arith.constant 0 : index
    %23 = vector.load %arg6[%c0_12, %c0_13] : memref<128x1xf32, #tpu.memory_space<vmem>>, vector<128x1xf32>
    %24 = vector.broadcast %23 : vector<128x1xf32> to vector<128x128xf32>
    %25 = arith.addf %22, %24 : vector<128x128xf32>
    %cst_14 = arith.constant 0.000000e+00 : f32
    %26 = vector.broadcast %cst_14 : f32 to vector<128x128xf32>
    %27 = arith.maximumf %25, %26 : vector<128x128xf32>
    %c0_15 = arith.constant 0 : index
    %c0_16 = arith.constant 0 : index
    %28 = vector.load %arg7[%c0_15, %c0_16] : memref<128x128xbf16, #tpu.memory_space<vmem>>, vector<128x128xbf16>
    %29 = arith.truncf %27 : vector<128x128xf32> to vector<128x128xbf16>
    %cst_17 = arith.constant dense<0.000000e+00> : vector<128x128xf32>
    %30 = tpu.matmul %28, %29, %cst_17 {dimension_numbers = #tpu.dot_dimension_numbers<[1], [0], [0], [1], [0, 0, 1, 1], [], []>} : vector<128x128xbf16>, vector<128x128xbf16>, vector<128x128xf32> -> vector<128x128xf32>
    %c0_18 = arith.constant 0 : index
    %c0_19 = arith.constant 0 : index
    %31 = vector.load %arg8[%c0_18, %c0_19] : memref<128x1xf32, #tpu.memory_space<vmem>>, vector<128x1xf32>
    %32 = vector.broadcast %31 : vector<128x1xf32> to vector<128x128xf32>
    %33 = arith.addf %30, %32 : vector<128x128xf32>
    %cst_20 = arith.constant 0.000000e+00 : f32
    %34 = vector.broadcast %cst_20 : f32 to vector<128x128xf32>
    %35 = arith.maximumf %33, %34 : vector<128x128xf32>
    %c0_21 = arith.constant 0 : index
    %c0_22 = arith.constant 0 : index
    %36 = vector.load %arg9[%c0_21, %c0_22] : memref<128x1xf32, #tpu.memory_space<vmem>>, vector<128x1xf32>
    %37 = vector.broadcast %36 : vector<128x1xf32> to vector<128x128xf32>
    %38 = arith.mulf %35, %37 : vector<128x128xf32>
    %cst_23 = arith.constant dense<0.000000e+00> : vector<128xf32>
    %39 = vector.multi_reduction <add>, %38, %cst_23 [0] : vector<128x128xf32> to vector<128xf32>
    %40 = vector.shape_cast %39 : vector<128xf32> to vector<1x128xf32>
    %c0_24 = arith.constant 0 : index
    %c0_25 = arith.constant 0 : index
    %41 = vector.load %arg10[%c0_24, %c0_25] : memref<1x1xf32, #tpu.memory_space<vmem>>, vector<1x1xf32>
    %42 = vector.broadcast %41 : vector<1x1xf32> to vector<1x128xf32>
    %43 = arith.addf %40, %42 : vector<1x128xf32>
    %c0_26 = arith.constant 0 : index
    %c0_27 = arith.constant 0 : index
    %44 = vector.load %arg11[%c0_26, %c0_27] : memref<1x128xf32, #tpu.memory_space<vmem>>, vector<1x128xf32>
    tpu.vector_store %arg11[%c0_26, %c0_27], %43 {strides = array<i32>} : memref<1x128xf32, #tpu.memory_space<vmem>>, vector<1x128xf32>,
    return
  }
  func.func @transform_0(%arg0: i32) -> (i32, i32) {
    %c0_i32 = arith.constant 0 : i32
    %c0_i32_0 = arith.constant 0 : i32
    return %c0_i32, %arg0 : i32, i32
  }
  func.func @transform_1(%arg0: i32) -> (i32, i32) {
    %c0_i32 = arith.constant 0 : i32
    %c0_i32_0 = arith.constant 0 : i32
    return %c0_i32, %arg0 : i32, i32
  }
  func.func @transform_2(%arg0: i32) -> (i32, i32) {
    %c0_i32 = arith.constant 0 : i32
    %c0_i32_0 = arith.constant 0 : i32
    %c0_i32_1 = arith.constant 0 : i32
    return %c0_i32, %c0_i32_0 : i32, i32
  }
  func.func @transform_3(%arg0: i32) -> (i32, i32) {
    %c0_i32 = arith.constant 0 : i32
    %c0_i32_0 = arith.constant 0 : i32
    %c0_i32_1 = arith.constant 0 : i32
    return %c0_i32, %c0_i32_0 : i32, i32
  }
  func.func @transform_4(%arg0: i32) -> (i32, i32) {
    %c0_i32 = arith.constant 0 : i32
    %c0_i32_0 = arith.constant 0 : i32
    %c0_i32_1 = arith.constant 0 : i32
    return %c0_i32, %c0_i32_0 : i32, i32
  }
  func.func @transform_5(%arg0: i32) -> (i32, i32) {
    %c0_i32 = arith.constant 0 : i32
    %c0_i32_0 = arith.constant 0 : i32
    %c0_i32_1 = arith.constant 0 : i32
    return %c0_i32, %c0_i32_0 : i32, i32
  }
  func.func @transform_6(%arg0: i32) -> (i32, i32) {
    %c0_i32 = arith.constant 0 : i32
    %c0_i32_0 = arith.constant 0 : i32
    %c0_i32_1 = arith.constant 0 : i32
    return %c0_i32, %c0_i32_0 : i32, i32
  }
  func.func @transform_7(%arg0: i32) -> (i32, i32) {
    %c0_i32 = arith.constant 0 : i32
    %c0_i32_0 = arith.constant 0 : i32
    %c0_i32_1 = arith.constant 0 : i32
    return %c0_i32, %c0_i32_0 : i32, i32
  }
  func.func @transform_8(%arg0: i32) -> (i32, i32) {
    %c0_i32 = arith.constant 0 : i32
    %c0_i32_0 = arith.constant 0 : i32
    %c0_i32_1 = arith.constant 0 : i32
    return %c0_i32, %c0_i32_0 : i32, i32
  }
  func.func @transform_9(%arg0: i32) -> (i32, i32) {
    %c0_i32 = arith.constant 0 : i32
    %c0_i32_0 = arith.constant 0 : i32
    %c0_i32_1 = arith.constant 0 : i32
    return %c0_i32, %c0_i32_0 : i32, i32
  }
  func.func @transform_10(%arg0: i32) -> (i32, i32) {
    %c0_i32 = arith.constant 0 : i32
    %c0_i32_0 = arith.constant 0 : i32
    return %c0_i32, %arg0 : i32, i32
  }
}

</mosaic_0001>

<llo_original>
// kernel: tpu_custom_call.1
$region0: #{tpu_custom_call.1}
  #allocation0 [shape = 'u32[]', space=smem, size = 0x4, offset = 0x4, fixed_abs, tag = 'smem constant byte address 0x4 - core index']
  #allocation1 [shape = 'u32[144,128]{1,0:T(1,128)}', space=vmem, size = 0x12000, scoped, tag = 'internal scratch']
  #allocation2 [shape = 'f32[1,1]{1,0:T(1,128)S(1)}', space=vmem, size = 0x200, scoped, tag = 'scoped memory for tpu_custom_call.1']
  %s0 = inlined_call_operand.vmem [shape: s32[1,128], index: 0, kind: input, shape index: {}]
  %s1 = inlined_call_operand.vmem [shape: s32[1,128], index: 1, kind: input, shape index: {}]
  %s2 = inlined_call_operand.vmem [shape: bf16[128,128], index: 2, kind: input, shape index: {}]
  %s3 = inlined_call_operand.vmem [shape: bf16[128,128], index: 3, kind: input, shape index: {}]
  %s4 = inlined_call_operand.vmem [shape: bf16[128,128], index: 4, kind: input, shape index: {}]
  %s5 = inlined_call_operand.vmem [shape: f32[128,1], index: 5, kind: input, shape index: {}]
  %s6 = inlined_call_operand.vmem [shape: bf16[128,128], index: 6, kind: input, shape index: {}]
  %s7 = inlined_call_operand.vmem [shape: f32[128,1], index: 7, kind: input, shape index: {}]
  %s8 = inlined_call_operand.vmem [shape: f32[128,1], index: 8, kind: input, shape index: {}]
  %s9 = inlined_call_operand.<no memory space> [shape: f32[1,1], index: 9, kind: input, shape index: {}]
  %s10 = inlined_call_operand.hbm [shape: f32[1,128], index: 10, kind: output, shape index: {}]
  %s11 = sld [smem:[#allocation0]]
  $region50: #{tpu_custom_call.1} parent=0
    _
  %s13 = ssub.s32 1, %s11
  %s14 = scalar_select 0, %s13, %s11
  %v15 = vstv %s9
  %16 = vst [vmem:[#allocation2] sm:$0x1] %v15
  $region1: #{tpu_custom_call.1} parent=0
    #allocation3 [shape = 'u8[512]{0}', space=vmem, size = 0x400, scoped, tag = 'output window, operand 0, single buffered']
    #allocation4 [shape = 's32[1]{0}', space=sflag, size = 0x4, scoped, tag = 'scoped memory for tpu_custom_call.1']
    %17 = vsyncpa [#allocation4], 0
    // Predicated region
    $region2: #{tpu_custom_call.1} parent=1 // pred_check
      _
    $region3: #{tpu_custom_call.1} parent=1 // pred_check_branch
      %19 = sbr.rel (0) target = $region5
    $region4: #{tpu_custom_call.1} parent=1 // pred_region
      _
    $region5: #{tpu_custom_call.1} parent=1 // pred_fallthru
      _
    // Predicated region
    $region6: #{tpu_custom_call.1} parent=1 // pred_check
      _
    $region7: #{tpu_custom_call.1} parent=1 // pred_check_branch
      %21 = sbr.rel (0) target = $region9
    $region8: #{tpu_custom_call.1} parent=1 // pred_region
      _
    $region9: #{tpu_custom_call.1} parent=1 // pred_fallthru
      _
    // Predicated region
    $region10: #{tpu_custom_call.1} parent=1 // pred_check
      _
    $region11: #{tpu_custom_call.1} parent=1 // pred_check_branch
      %23 = sbr.rel (0) target = $region13
    $region12: #{tpu_custom_call.1} parent=1 // pred_region
      _
    $region13: #{tpu_custom_call.1} parent=1 // pred_fallthru
      _
    // Predicated region
    $region14: #{tpu_custom_call.1} parent=1 // pred_check
      _
    $region15: #{tpu_custom_call.1} parent=1 // pred_check_branch
      %25 = sbr.rel (0) target = $region17
    $region16: #{tpu_custom_call.1} parent=1 // pred_region
      _
    $region17: #{tpu_custom_call.1} parent=1 // pred_fallthru
      _
    // Predicated region
    $region18: #{tpu_custom_call.1} parent=1 // pred_check
      _
    $region19: #{tpu_custom_call.1} parent=1 // pred_check_branch
      %27 = sbr.rel (0) target = $region21
    $region20: #{tpu_custom_call.1} parent=1 // pred_region
      _
    $region21: #{tpu_custom_call.1} parent=1 // pred_fallthru
      _
    // Predicated region
    $region22: #{tpu_custom_call.1} parent=1 // pred_check
      _
    $region23: #{tpu_custom_call.1} parent=1 // pred_check_branch
      %29 = sbr.rel (0) target = $region25
    $region24: #{tpu_custom_call.1} parent=1 // pred_region
      _
    $region25: #{tpu_custom_call.1} parent=1 // pred_fallthru
      _
    // Predicated region
    $region26: #{tpu_custom_call.1} parent=1 // pred_check
      _
    $region27: #{tpu_custom_call.1} parent=1 // pred_check_branch
      %31 = sbr.rel (0) target = $region29
    $region28: #{tpu_custom_call.1} parent=1 // pred_region
      _
    $region29: #{tpu_custom_call.1} parent=1 // pred_fallthru
      _
    // Predicated region
    $region30: #{tpu_custom_call.1} parent=1 // pred_check
      _
    $region31: #{tpu_custom_call.1} parent=1 // pred_check_branch
      %33 = sbr.rel (0) target = $region33
    $region32: #{tpu_custom_call.1} parent=1 // pred_region
      _
    $region33: #{tpu_custom_call.1} parent=1 // pred_fallthru
      _
    // Predicated region
    $region34: #{tpu_custom_call.1} parent=1 // pred_check
      _
    $region35: #{tpu_custom_call.1} parent=1 // pred_check_branch
      %35 = sbr.rel (0) target = $region37
    $region36: #{tpu_custom_call.1} parent=1 // pred_region
      _
    $region37: #{tpu_custom_call.1} parent=1 // pred_fallthru
      _
    // Predicated region
    $region38: #{tpu_custom_call.1} parent=1 // pred_check
      _
    $region39: #{tpu_custom_call.1} parent=1 // pred_check_branch
      %37 = sbr.rel (0) target = $region41
    $region40: #{tpu_custom_call.1} parent=1 // pred_region
      _
    $region41: #{tpu_custom_call.1} parent=1 // pred_fallthru
      _
    %v39 = vlaneseq
    %v40 = vshrl.u32 %v39, 7
    %v41 = vadd.s32 %v40, 8
    %v42 = vadd.s32 %v40, 16
    %v43 = vadd.s32 %v40, 24
    %v44 = vadd.s32 %v40, 32
    %v45 = vadd.s32 %v40, 40
    %v46 = vadd.s32 %v40, 48
    %v47 = vadd.s32 %v40, 56
    %v48 = vadd.s32 %v40, 64
    %v49 = vadd.s32 %v40, 72
    %v50 = vadd.s32 %v40, 80
    %v51 = vadd.s32 %v40, 88
    %v52 = vadd.s32 %v40, 96
    %v53 = vadd.s32 %v40, 104
    %v54 = vadd.s32 %v40, 112
    %v55 = vadd.s32 %v40, 120
    %v56 = vld [vmem:[%s2] sm:$0xf]
    %v57 = vld [vmem:[%s2 + $0x4] sm:$0xf]
    %v58 = vld [vmem:[%s2 + $0x8] sm:$0xf]
    %v59 = vld [vmem:[%s2 + $0xc] sm:$0xf]
    %v60 = vld [vmem:[%s2 + $0x10] sm:$0xf]
    %v61 = vld [vmem:[%s2 + $0x14] sm:$0xf]
    %v62 = vld [vmem:[%s2 + $0x18] sm:$0xf]
    %v63 = vld [vmem:[%s2 + $0x1c] sm:$0xf]
    %v64 = vld [vmem:[%s2 + $0x20] sm:$0xf]
    %v65 = vld [vmem:[%s2 + $0x24] sm:$0xf]
    %v66 = vld [vmem:[%s2 + $0x28] sm:$0xf]
    %v67 = vld [vmem:[%s2 + $0x2c] sm:$0xf]
    %v68 = vld [vmem:[%s2 + $0x30] sm:$0xf]
    %v69 = vld [vmem:[%s2 + $0x34] sm:$0xf]
    %v70 = vld [vmem:[%s2 + $0x38] sm:$0xf]
    %v71 = vld [vmem:[%s2 + $0x3c] sm:$0xf]
    %v72 = vld [vmem:[%s0] sm:$0x1]
    %v73 = vlaneseq
    %v74 = vshrl.u32 %v73, 7
    %v75 = vsub.s32 0, %v74
    %v76 = vrot.slane %v72, %v75
    %vm77 = vcmp.eq.s32.totalorder %v40, %v76
    %vm78 = vcmp.eq.s32.totalorder %v41, %v76
    %vm79 = vcmp.eq.s32.totalorder %v42, %v76
    %vm80 = vcmp.eq.s32.totalorder %v43, %v76
    %vm81 = vcmp.eq.s32.totalorder %v44, %v76
    %vm82 = vcmp.eq.s32.totalorder %v45, %v76
    %vm83 = vcmp.eq.s32.totalorder %v46, %v76
    %vm84 = vcmp.eq.s32.totalorder %v47, %v76
    %vm85 = vcmp.eq.s32.totalorder %v48, %v76
    %vm86 = vcmp.eq.s32.totalorder %v49, %v76
    %vm87 = vcmp.eq.s32.totalorder %v50, %v76
    %vm88 = vcmp.eq.s32.totalorder %v51, %v76
    %vm89 = vcmp.eq.s32.totalorder %v52, %v76
    %vm90 = vcmp.eq.s32.totalorder %v53, %v76
    %vm91 = vcmp.eq.s32.totalorder %v54, %v76
    %vm92 = vcmp.eq.s32.totalorder %v55, %v76
    %v93 = vsel %vm77, 1, 0
    %v94 = vsel %vm78, 1, 0
    %v95 = vsel %vm79, 1, 0
    %v96 = vsel %vm80, 1, 0
    %v97 = vsel %vm81, 1, 0
    %v98 = vsel %vm82, 1, 0
    %v99 = vsel %vm83, 1, 0
    %v100 = vsel %vm84, 1, 0
    %v101 = vsel %vm85, 1, 0
    %v102 = vsel %vm86, 1, 0
    %v103 = vsel %vm87, 1, 0
    %v104 = vsel %vm88, 1, 0
    %v105 = vsel %vm89, 1, 0
    %v106 = vsel %vm90, 1, 0
    %v107 = vsel %vm91, 1, 0
    %v108 = vsel %vm92, 1, 0
    %v109 = vcvt.s32.f32 %v93
    %v110 = vcvt.s32.f32 %v94
    %v111 = vcvt.s32.f32 %v95
    %v112 = vcvt.s32.f32 %v96
    %v113 = vcvt.s32.f32 %v97
    %v114 = vcvt.s32.f32 %v98
    %v115 = vcvt.s32.f32 %v99
    %v116 = vcvt.s32.f32 %v100
    %v117 = vcvt.s32.f32 %v101
    %v118 = vcvt.s32.f32 %v102
    %v119 = vcvt.s32.f32 %v103
    %v120 = vcvt.s32.f32 %v104
    %v121 = vcvt.s32.f32 %v105
    %v122 = vcvt.s32.f32 %v106
    %v123 = vcvt.s32.f32 %v107
    %v124 = vcvt.s32.f32 %v108
    %v125 = vpack.c.bf16 %v110, %v109
    %v126 = vpack.c.bf16 %v112, %v111
    %v127 = vpack.c.bf16 %v114, %v113
    %v128 = vpack.c.bf16 %v116, %v115
    %v129 = vpack.c.bf16 %v118, %v117
    %v130 = vpack.c.bf16 %v120, %v119
    %v131 = vpack.c.bf16 %v122, %v121
    %v132 = vpack.c.bf16 %v124, %v123
    %v133 = vld [vmem:[%s1] sm:$0x1]
    %v134 = vlaneseq
    %v135 = vshrl.u32 %v134, 7
    %v136 = vsub.s32 0, %v135
    %v137 = vrot.slane %v133, %v136
    %vm138 = vcmp.eq.s32.totalorder %v40, %v137
    %vm139 = vcmp.eq.s32.totalorder %v41, %v137
    %vm140 = vcmp.eq.s32.totalorder %v42, %v137
    %vm141 = vcmp.eq.s32.totalorder %v43, %v137
    %vm142 = vcmp.eq.s32.totalorder %v44, %v137
    %vm143 = vcmp.eq.s32.totalorder %v45, %v137
    %vm144 = vcmp.eq.s32.totalorder %v46, %v137
    %vm145 = vcmp.eq.s32.totalorder %v47, %v137
    %vm146 = vcmp.eq.s32.totalorder %v48, %v137
    %vm147 = vcmp.eq.s32.totalorder %v49, %v137
    %vm148 = vcmp.eq.s32.totalorder %v50, %v137
    %vm149 = vcmp.eq.s32.totalorder %v51, %v137
    %vm150 = vcmp.eq.s32.totalorder %v52, %v137
    %vm151 = vcmp.eq.s32.totalorder %v53, %v137
    %vm152 = vcmp.eq.s32.totalorder %v54, %v137
    %vm153 = vcmp.eq.s32.totalorder %v55, %v137
    %v154 = vsel %vm138, 1, 0
    %v155 = vsel %vm139, 1, 0
    %v156 = vsel %vm140, 1, 0
    %v157 = vsel %vm141, 1, 0
    %v158 = vsel %vm142, 1, 0
    %v159 = vsel %vm143, 1, 0
    %v160 = vsel %vm144, 1, 0
    %v161 = vsel %vm145, 1, 0
    %v162 = vsel %vm146, 1, 0
    %v163 = vsel %vm147, 1, 0
    %v164 = vsel %vm148, 1, 0
    %v165 = vsel %vm149, 1, 0
    %v166 = vsel %vm150, 1, 0
    %v167 = vsel %vm151, 1, 0
    %v168 = vsel %vm152, 1, 0
    %v169 = vsel %vm153, 1, 0
    %v170 = vcvt.s32.f32 %v154
    %v171 = vcvt.s32.f32 %v155
    %v172 = vcvt.s32.f32 %v156
    %v173 = vcvt.s32.f32 %v157
    %v174 = vcvt.s32.f32 %v158
    %v175 = vcvt.s32.f32 %v159
    %v176 = vcvt.s32.f32 %v160
    %v177 = vcvt.s32.f32 %v161
    %v178 = vcvt.s32.f32 %v162
    %v179 = vcvt.s32.f32 %v163
    %v180 = vcvt.s32.f32 %v164
    %v181 = vcvt.s32.f32 %v165
    %v182 = vcvt.s32.f32 %v166
    %v183 = vcvt.s32.f32 %v167
    %v184 = vcvt.s32.f32 %v168
    %v185 = vcvt.s32.f32 %v169
    %v186 = vpack.c.bf16 %v171, %v170
    %v187 = vpack.c.bf16 %v173, %v172
    %v188 = vpack.c.bf16 %v175, %v174
    %v189 = vpack.c.bf16 %v177, %v176
    %v190 = vpack.c.bf16 %v179, %v178
    %v191 = vpack.c.bf16 %v181, %v180
    %v192 = vpack.c.bf16 %v183, %v182
    %v193 = vpack.c.bf16 %v185, %v184
    %v210 = vunpack.c.l.b16 %v56
    %v211 = vunpack.c.l.b16 %v57
    %v212 = vunpack.c.l.b16 %v58
    %v213 = vunpack.c.l.b16 %v59
    %v214 = vunpack.c.l.b16 %v60
    %v215 = vunpack.c.l.b16 %v61
    %v216 = vunpack.c.l.b16 %v62
    %v217 = vunpack.c.l.b16 %v63
    %v218 = vunpack.c.l.b16 %v64
    %v219 = vunpack.c.l.b16 %v65
    %v220 = vunpack.c.l.b16 %v66
    %v221 = vunpack.c.l.b16 %v67
    %v222 = vunpack.c.l.b16 %v68
    %v223 = vunpack.c.l.b16 %v69
    %v224 = vunpack.c.l.b16 %v70
    %v225 = vunpack.c.l.b16 %v71
    %v226 = vpack.c.b16 %v211, %v210
    %v227 = vpack.c.b16 %v213, %v212
    %v228 = vpack.c.b16 %v215, %v214
    %v229 = vpack.c.b16 %v217, %v216
    %v230 = vpack.c.b16 %v219, %v218
    %v231 = vpack.c.b16 %v221, %v220
    %v232 = vpack.c.b16 %v223, %v222
    %v233 = vpack.c.b16 %v225, %v224
    %242 = vmatprep.subr.bf16.mxu0 0
    %243 = vmatpush1.bf16.msra.mxu0 %v125
    %244 = vmatprep.subr.bf16.mxu0 0
    %245 = vmatpush1.bf16.msra.mxu0 %v126
    %246 = vmatprep.subr.bf16.mxu0 0
    %247 = vmatpush1.bf16.msra.mxu0 %v127
    %248 = vmatprep.subr.bf16.mxu0 0
    %249 = vmatpush1.bf16.msra.mxu0 %v128
    %250 = vmatprep.subr.bf16.mxu0 0
    %251 = vmatpush1.bf16.msra.mxu0 %v129
    %252 = vmatprep.subr.bf16.mxu0 0
    %253 = vmatpush1.bf16.msra.mxu0 %v130
    %254 = vmatprep.subr.bf16.mxu0 0
    %255 = vmatpush1.bf16.msra.mxu0 %v131
    %256 = vmatprep.subr.bf16.mxu0 0
    %257 = vmatpush1.bf16.msra.mxu0 %v132
    %258 = vmatprep.subr.bf16.mxu0 0
    %259 = vmatpush1.bf16.msra.mxu0 0
    %260 = vmatprep.subr.bf16.mxu0 0
    %261 = vmatpush1.bf16.msra.mxu0 0
    %262 = vmatprep.subr.bf16.mxu0 0
    %263 = vmatpush1.bf16.msra.mxu0 0
    %264 = vmatprep.subr.bf16.mxu0 0
    %265 = vmatpush1.bf16.msra.mxu0 0
    %266 = vmatprep.subr.bf16.mxu0 0
    %267 = vmatpush1.bf16.msra.mxu0 0
    %268 = vmatprep.subr.bf16.mxu0 0
    %269 = vmatpush1.bf16.msra.mxu0 0
    %270 = vmatprep.subr.bf16.mxu0 0
    %271 = vmatpush1.bf16.msra.mxu0 0
    %272 = vmatprep.subr.bf16.mxu0 0
    %273 = vmatpush1.bf16.msra.mxu0 0
    %274 = vmatprep.mubr.bf16.mxu0 0
    %275 = vmatmul.mubr.bf16.gmra.mrb[0].mxu0 %v226
    %v276 = vpop.f32.mrb[0].mxu0
    %v277 = vadd.f32 0.0, %v276
    %v278 = vpop.f32.mrb[0].mxu0
    %v279 = vpop.f32.mrb[0].mxu0
    %v280 = vadd.f32 0.0, %v279
    %v281 = vpop.f32.mrb[0].mxu0
    %282 = vmatprep.mubr.bf16.mxu0 0
    %283 = vmatmul.mubr.bf16.gmra.mrb[0].mxu0 %v227
    %v284 = vpop.f32.mrb[0].mxu0
    %v285 = vadd.f32 0.0, %v284
    %v286 = vpop.f32.mrb[0].mxu0
    %v287 = vpop.f32.mrb[0].mxu0
    %v288 = vadd.f32 0.0, %v287
    %v289 = vpop.f32.mrb[0].mxu0
    %290 = vmatprep.mubr.bf16.mxu0 0
    %291 = vmatmul.mubr.bf16.gmra.mrb[0].mxu0 %v228
    %v292 = vpop.f32.mrb[0].mxu0
    %v293 = vadd.f32 0.0, %v292
    %v294 = vpop.f32.mrb[0].mxu0
    %v295 = vpop.f32.mrb[0].mxu0
    %v296 = vadd.f32 0.0, %v295
    %v297 = vpop.f32.mrb[0].mxu0
    %298 = vmatprep.mubr.bf16.mxu0 0
    %299 = vmatmul.mubr.bf16.gmra.mrb[0].mxu0 %v229
    %v300 = vpop.f32.mrb[0].mxu0
    %v301 = vadd.f32 0.0, %v300
    %v302 = vpop.f32.mrb[0].mxu0
    %v303 = vpop.f32.mrb[0].mxu0
    %v304 = vadd.f32 0.0, %v303
    %v305 = vpop.f32.mrb[0].mxu0
    %306 = vmatprep.mubr.bf16.mxu0 0
    %307 = vmatmul.mubr.bf16.gmra.mrb[0].mxu0 %v230
    %v308 = vpop.f32.mrb[0].mxu0
    %v309 = vadd.f32 0.0, %v308
    %v310 = vpop.f32.mrb[0].mxu0
    %v311 = vpop.f32.mrb[0].mxu0
    %v312 = vadd.f32 0.0, %v311
    %v313 = vpop.f32.mrb[0].mxu0
    %314 = vmatprep.mubr.bf16.mxu0 0
    %315 = vmatmul.mubr.bf16.gmra.mrb[0].mxu0 %v231
    %v316 = vpop.f32.mrb[0].mxu0
    %v317 = vadd.f32 0.0, %v316
    %v318 = vpop.f32.mrb[0].mxu0
    %v319 = vpop.f32.mrb[0].mxu0
    %v320 = vadd.f32 0.0, %v319
    %v321 = vpop.f32.mrb[0].mxu0
    %322 = vmatprep.mubr.bf16.mxu0 0
    %323 = vmatmul.mubr.bf16.gmra.mrb[0].mxu0 %v232
    %v324 = vpop.f32.mrb[0].mxu0
    %v325 = vadd.f32 0.0, %v324
    %v326 = vpop.f32.mrb[0].mxu0
    %v327 = vpop.f32.mrb[0].mxu0
    %v328 = vadd.f32 0.0, %v327
    %v329 = vpop.f32.mrb[0].mxu0
    %330 = vmatprep.mubr.bf16.mxu0 0
    %331 = vmatmul.mubr.bf16.gmra.mrb[0].mxu0 %v233
    %v332 = vpop.f32.mrb[0].mxu0
    %v333 = vadd.f32 0.0, %v332
    %v334 = vpop.f32.mrb[0].mxu0
    %v335 = vpop.f32.mrb[0].mxu0
    %v336 = vadd.f32 0.0, %v335
    %v337 = vpop.f32.mrb[0].mxu0
    %338 = vdwg.mxu0
    %v339 = vpack.c.bf16 %v280, %v277
    %v340 = vpack.c.bf16 %v288, %v285
    %v341 = vpack.c.bf16 %v296, %v293
    %v342 = vpack.c.bf16 %v304, %v301
    %v343 = vpack.c.bf16 %v312, %v309
    %v344 = vpack.c.bf16 %v320, %v317
    %v345 = vpack.c.bf16 %v328, %v325
    %v346 = vpack.c.bf16 %v336, %v333
    %347 = vmatprep.subr.bf16.mxu0 0
    %348 = vmatpush1.bf16.msra.mxu0 %v186
    %349 = vmatprep.subr.bf16.mxu0 0
    %350 = vmatpush1.bf16.msra.mxu0 %v187
    %351 = vmatprep.subr.bf16.mxu0 0
    %352 = vmatpush1.bf16.msra.mxu0 %v188
    %353 = vmatprep.subr.bf16.mxu0 0
    %354 = vmatpush1.bf16.msra.mxu0 %v189
    %355 = vmatprep.subr.bf16.mxu0 0
    %356 = vmatpush1.bf16.msra.mxu0 %v190
    %357 = vmatprep.subr.bf16.mxu0 0
    %358 = vmatpush1.bf16.msra.mxu0 %v191
    %359 = vmatprep.subr.bf16.mxu0 0
    %360 = vmatpush1.bf16.msra.mxu0 %v192
    %361 = vmatprep.subr.bf16.mxu0 0
    %362 = vmatpush1.bf16.msra.mxu0 %v193
    %363 = vmatprep.subr.bf16.mxu0 0
    %364 = vmatpush1.bf16.msra.mxu0 0
    %365 = vmatprep.subr.bf16.mxu0 0
    %366 = vmatpush1.bf16.msra.mxu0 0
    %367 = vmatprep.subr.bf16.mxu0 0
    %368 = vmatpush1.bf16.msra.mxu0 0
    %369 = vmatprep.subr.bf16.mxu0 0
    %370 = vmatpush1.bf16.msra.mxu0 0
    %371 = vmatprep.subr.bf16.mxu0 0
    %372 = vmatpush1.bf16.msra.mxu0 0
    %373 = vmatprep.subr.bf16.mxu0 0
    %374 = vmatpush1.bf16.msra.mxu0 0
    %375 = vmatprep.subr.bf16.mxu0 0
    %376 = vmatpush1.bf16.msra.mxu0 0
    %377 = vmatprep.subr.bf16.mxu0 0
    %378 = vmatpush1.bf16.msra.mxu0 0
    %379 = vmatprep.mubr.bf16.mxu0 0
    %380 = vmatmul.mubr.bf16.gmra.mrb[0].mxu0 %v226
    %v381 = vpop.f32.mrb[0].mxu0
    %v382 = vadd.f32 0.0, %v381
    %v383 = vpop.f32.mrb[0].mxu0
    %v384 = vpop.f32.mrb[0].mxu0
    %v385 = vadd.f32 0.0, %v384
    %v386 = vpop.f32.mrb[0].mxu0
    %387 = vmatprep.mubr.bf16.mxu0 0
    %388 = vmatmul.mubr.bf16.gmra.mrb[0].mxu0 %v227
    %v389 = vpop.f32.mrb[0].mxu0
    %v390 = vadd.f32 0.0, %v389
    %v391 = vpop.f32.mrb[0].mxu0
    %v392 = vpop.f32.mrb[0].mxu0
    %v393 = vadd.f32 0.0, %v392
    %v394 = vpop.f32.mrb[0].mxu0
    %395 = vmatprep.mubr.bf16.mxu0 0
    %396 = vmatmul.mubr.bf16.gmra.mrb[0].mxu0 %v228
    %v397 = vpop.f32.mrb[0].mxu0
    %v398 = vadd.f32 0.0, %v397
    %v399 = vpop.f32.mrb[0].mxu0
    %v400 = vpop.f32.mrb[0].mxu0
    %v401 = vadd.f32 0.0, %v400
    %v402 = vpop.f32.mrb[0].mxu0
    %403 = vmatprep.mubr.bf16.mxu0 0
    %404 = vmatmul.mubr.bf16.gmra.mrb[0].mxu0 %v229
    %v405 = vpop.f32.mrb[0].mxu0
    %v406 = vadd.f32 0.0, %v405
    %v407 = vpop.f32.mrb[0].mxu0
    %v408 = vpop.f32.mrb[0].mxu0
    %v409 = vadd.f32 0.0, %v408
    %v410 = vpop.f32.mrb[0].mxu0
    %411 = vmatprep.mubr.bf16.mxu0 0
    %412 = vmatmul.mubr.bf16.gmra.mrb[0].mxu0 %v230
    %v413 = vpop.f32.mrb[0].mxu0
    %v414 = vadd.f32 0.0, %v413
    %v415 = vpop.f32.mrb[0].mxu0
    %v416 = vpop.f32.mrb[0].mxu0
    %v417 = vadd.f32 0.0, %v416
    %v418 = vpop.f32.mrb[0].mxu0
    %419 = vmatprep.mubr.bf16.mxu0 0
    %420 = vmatmul.mubr.bf16.gmra.mrb[0].mxu0 %v231
    %v421 = vpop.f32.mrb[0].mxu0
    %v422 = vadd.f32 0.0, %v421
    %v423 = vpop.f32.mrb[0].mxu0
    %v424 = vpop.f32.mrb[0].mxu0
    %v425 = vadd.f32 0.0, %v424
    %v426 = vpop.f32.mrb[0].mxu0
    %427 = vmatprep.mubr.bf16.mxu0 0
    %428 = vmatmul.mubr.bf16.gmra.mrb[0].mxu0 %v232
    %v429 = vpop.f32.mrb[0].mxu0
    %v430 = vadd.f32 0.0, %v429
    %v431 = vpop.f32.mrb[0].mxu0
    %v432 = vpop.f32.mrb[0].mxu0
    %v433 = vadd.f32 0.0, %v432
    %v434 = vpop.f32.mrb[0].mxu0
    %435 = vmatprep.mubr.bf16.mxu0 0
    %436 = vmatmul.mubr.bf16.gmra.mrb[0].mxu0 %v233
    %v437 = vpop.f32.mrb[0].mxu0
    %v438 = vadd.f32 0.0, %v437
    %v439 = vpop.f32.mrb[0].mxu0
    %v440 = vpop.f32.mrb[0].mxu0
    %v441 = vadd.f32 0.0, %v440
    %v442 = vpop.f32.mrb[0].mxu0
    %443 = vdwg.mxu0
    %v444 = vpack.c.bf16 %v385, %v382
    %v445 = vpack.c.bf16 %v393, %v390
    %v446 = vpack.c.bf16 %v401, %v398
    %v447 = vpack.c.bf16 %v409, %v406
    %v448 = vpack.c.bf16 %v417, %v414
    %v449 = vpack.c.bf16 %v425, %v422
    %v450 = vpack.c.bf16 %v433, %v430
    %v451 = vpack.c.bf16 %v441, %v438
    %v452 = vld [vmem:[%s3] sm:$0xf]
    %v453 = vld [vmem:[%s3 + $0x4] sm:$0xf]
    %v454 = vld [vmem:[%s3 + $0x8] sm:$0xf]
    %v455 = vld [vmem:[%s3 + $0xc] sm:$0xf]
    %v456 = vld [vmem:[%s3 + $0x10] sm:$0xf]
    %v457 = vld [vmem:[%s3 + $0x14] sm:$0xf]
    %v458 = vld [vmem:[%s3 + $0x18] sm:$0xf]
    %v459 = vld [vmem:[%s3 + $0x1c] sm:$0xf]
    %v460 = vld [vmem:[%s3 + $0x20] sm:$0xf]
    %v461 = vld [vmem:[%s3 + $0x24] sm:$0xf]
    %v462 = vld [vmem:[%s3 + $0x28] sm:$0xf]
    %v463 = vld [vmem:[%s3 + $0x2c] sm:$0xf]
    %v464 = vld [vmem:[%s3 + $0x30] sm:$0xf]
    %v465 = vld [vmem:[%s3 + $0x34] sm:$0xf]
    %v466 = vld [vmem:[%s3 + $0x38] sm:$0xf]
    %v467 = vld [vmem:[%s3 + $0x3c] sm:$0xf]
    %v468 = vld [vmem:[%s4] sm:$0xf]
    %v469 = vld [vmem:[%s4 + $0x4] sm:$0xf]
    %v470 = vld [vmem:[%s4 + $0x8] sm:$0xf]
    %v471 = vld [vmem:[%s4 + $0xc] sm:$0xf]
    %v472 = vld [vmem:[%s4 + $0x10] sm:$0xf]
    %v473 = vld [vmem:[%s4 + $0x14] sm:$0xf]
    %v474 = vld [vmem:[%s4 + $0x18] sm:$0xf]
    %v475 = vld [vmem:[%s4 + $0x1c] sm:$0xf]
    %v476 = vld [vmem:[%s4 + $0x20] sm:$0xf]
    %v477 = vld [vmem:[%s4 + $0x24] sm:$0xf]
    %v478 = vld [vmem:[%s4 + $0x28] sm:$0xf]
    %v479 = vld [vmem:[%s4 + $0x2c] sm:$0xf]
    %v480 = vld [vmem:[%s4 + $0x30] sm:$0xf]
    %v481 = vld [vmem:[%s4 + $0x34] sm:$0xf]
    %v482 = vld [vmem:[%s4 + $0x38] sm:$0xf]
    %v483 = vld [vmem:[%s4 + $0x3c] sm:$0xf]
    %v500 = vunpack.c.l.b16 %v468
    %v501 = vunpack.c.l.b16 %v469
    %v502 = vunpack.c.l.b16 %v470
    %v503 = vunpack.c.l.b16 %v471
    %v504 = vunpack.c.l.b16 %v472
    %v505 = vunpack.c.l.b16 %v473
    %v506 = vunpack.c.l.b16 %v474
    %v507 = vunpack.c.l.b16 %v475
    %v508 = vunpack.c.l.b16 %v476
    %v509 = vunpack.c.l.b16 %v477
    %v510 = vunpack.c.l.b16 %v478
    %v511 = vunpack.c.l.b16 %v479
    %v512 = vunpack.c.l.b16 %v480
    %v513 = vunpack.c.l.b16 %v481
    %v514 = vunpack.c.l.b16 %v482
    %v515 = vunpack.c.l.b16 %v483
    %v516 = vpack.c.b16 %v501, %v500
    %v517 = vpack.c.b16 %v503, %v502
    %v518 = vpack.c.b16 %v505, %v504
    %v519 = vpack.c.b16 %v507, %v506
    %v520 = vpack.c.b16 %v509, %v508
    %v521 = vpack.c.b16 %v511, %v510
    %v522 = vpack.c.b16 %v513, %v512
    %v523 = vpack.c.b16 %v515, %v514
    %532 = vmatprep.subr.bf16.mxu0 0
    %533 = vmatpush1.bf16.msra.mxu0 %v444
    %534 = vmatprep.subr.bf16.mxu0 0
    %535 = vmatpush1.bf16.msra.mxu0 %v445
    %536 = vmatprep.subr.bf16.mxu0 0
    %537 = vmatpush1.bf16.msra.mxu0 %v446
    %538 = vmatprep.subr.bf16.mxu0 0
    %539 = vmatpush1.bf16.msra.mxu0 %v447
    %540 = vmatprep.subr.bf16.mxu0 0
    %541 = vmatpush1.bf16.msra.mxu0 %v448
    %542 = vmatprep.subr.bf16.mxu0 0
    %543 = vmatpush1.bf16.msra.mxu0 %v449
    %544 = vmatprep.subr.bf16.mxu0 0
    %545 = vmatpush1.bf16.msra.mxu0 %v450
    %546 = vmatprep.subr.bf16.mxu0 0
    %547 = vmatpush1.bf16.msra.mxu0 %v451
    %548 = vmatprep.subr.bf16.mxu0 0
    %549 = vmatpush1.bf16.msra.mxu0 0
    %550 = vmatprep.subr.bf16.mxu0 0
    %551 = vmatpush1.bf16.msra.mxu0 0
    %552 = vmatprep.subr.bf16.mxu0 0
    %553 = vmatpush1.bf16.msra.mxu0 0
    %554 = vmatprep.subr.bf16.mxu0 0
    %555 = vmatpush1.bf16.msra.mxu0 0
    %556 = vmatprep.subr.bf16.mxu0 0
    %557 = vmatpush1.bf16.msra.mxu0 0
    %558 = vmatprep.subr.bf16.mxu0 0
    %559 = vmatpush1.bf16.msra.mxu0 0
    %560 = vmatprep.subr.bf16.mxu0 0
    %561 = vmatpush1.bf16.msra.mxu0 0
    %562 = vmatprep.subr.bf16.mxu0 0
    %563 = vmatpush1.bf16.msra.mxu0 0
    %564 = vmatprep.mubr.bf16.mxu0 0
    %565 = vmatmul.mubr.bf16.gmra.mrb[0].mxu0 %v516
    %v566 = vpop.f32.mrb[0].mxu0
    %v567 = vadd.f32 0.0, %v566
    %v568 = vpop.f32.mrb[0].mxu0
    %v569 = vpop.f32.mrb[0].mxu0
    %v570 = vadd.f32 0.0, %v569
    %v571 = vpop.f32.mrb[0].mxu0
    %572 = vmatprep.mubr.bf16.mxu0 0
    %573 = vmatmul.mubr.bf16.gmra.mrb[0].mxu0 %v517
    %v574 = vpop.f32.mrb[0].mxu0
    %v575 = vadd.f32 0.0, %v574
    %v576 = vpop.f32.mrb[0].mxu0
    %v577 = vpop.f32.mrb[0].mxu0
    %v578 = vadd.f32 0.0, %v577
    %v579 = vpop.f32.mrb[0].mxu0
    %580 = vmatprep.mubr.bf16.mxu0 0
    %581 = vmatmul.mubr.bf16.gmra.mrb[0].mxu0 %v518
    %v582 = vpop.f32.mrb[0].mxu0
    %v583 = vadd.f32 0.0, %v582
    %v584 = vpop.f32.mrb[0].mxu0
    %v585 = vpop.f32.mrb[0].mxu0
    %v586 = vadd.f32 0.0, %v585
    %v587 = vpop.f32.mrb[0].mxu0
    %588 = vmatprep.mubr.bf16.mxu0 0
    %589 = vmatmul.mubr.bf16.gmra.mrb[0].mxu0 %v519
    %v590 = vpop.f32.mrb[0].mxu0
    %v591 = vadd.f32 0.0, %v590
    %v592 = vpop.f32.mrb[0].mxu0
    %v593 = vpop.f32.mrb[0].mxu0
    %v594 = vadd.f32 0.0, %v593
    %v595 = vpop.f32.mrb[0].mxu0
    %596 = vmatprep.mubr.bf16.mxu0 0
    %597 = vmatmul.mubr.bf16.gmra.mrb[0].mxu0 %v520
    %v598 = vpop.f32.mrb[0].mxu0
    %v599 = vadd.f32 0.0, %v598
    %v600 = vpop.f32.mrb[0].mxu0
    %v601 = vpop.f32.mrb[0].mxu0
    %v602 = vadd.f32 0.0, %v601
    %v603 = vpop.f32.mrb[0].mxu0
    %604 = vmatprep.mubr.bf16.mxu0 0
    %605 = vmatmul.mubr.bf16.gmra.mrb[0].mxu0 %v521
    %v606 = vpop.f32.mrb[0].mxu0
    %v607 = vadd.f32 0.0, %v606
    %v608 = vpop.f32.mrb[0].mxu0
    %v609 = vpop.f32.mrb[0].mxu0
    %v610 = vadd.f32 0.0, %v609
    %v611 = vpop.f32.mrb[0].mxu0
    %612 = vmatprep.mubr.bf16.mxu0 0
    %613 = vmatmul.mubr.bf16.gmra.mrb[0].mxu0 %v522
    %v614 = vpop.f32.mrb[0].mxu0
    %v615 = vadd.f32 0.0, %v614
    %v616 = vpop.f32.mrb[0].mxu0
    %v617 = vpop.f32.mrb[0].mxu0
    %v618 = vadd.f32 0.0, %v617
    %v619 = vpop.f32.mrb[0].mxu0
    %620 = vmatprep.mubr.bf16.mxu0 0
    %621 = vmatmul.mubr.bf16.gmra.mrb[0].mxu0 %v523
    %v622 = vpop.f32.mrb[0].mxu0
    %v623 = vadd.f32 0.0, %v622
    %v624 = vpop.f32.mrb[0].mxu0
    %v625 = vpop.f32.mrb[0].mxu0
    %v626 = vadd.f32 0.0, %v625
    %v627 = vpop.f32.mrb[0].mxu0
    %628 = vdwg.mxu0
    %v645 = vunpack.c.l.b16 %v452
    %v646 = vunpack.c.l.b16 %v453
    %v647 = vunpack.c.l.b16 %v454
    %v648 = vunpack.c.l.b16 %v455
    %v649 = vunpack.c.l.b16 %v456
    %v650 = vunpack.c.l.b16 %v457
    %v651 = vunpack.c.l.b16 %v458
    %v652 = vunpack.c.l.b16 %v459
    %v653 = vunpack.c.l.b16 %v460
    %v654 = vunpack.c.l.b16 %v461
    %v655 = vunpack.c.l.b16 %v462
    %v656 = vunpack.c.l.b16 %v463
    %v657 = vunpack.c.l.b16 %v464
    %v658 = vunpack.c.l.b16 %v465
    %v659 = vunpack.c.l.b16 %v466
    %v660 = vunpack.c.l.b16 %v467
    %v661 = vpack.c.b16 %v646, %v645
    %v662 = vpack.c.b16 %v648, %v647
    %v663 = vpack.c.b16 %v650, %v649
    %v664 = vpack.c.b16 %v652, %v651
    %v665 = vpack.c.b16 %v654, %v653
    %v666 = vpack.c.b16 %v656, %v655
    %v667 = vpack.c.b16 %v658, %v657
    %v668 = vpack.c.b16 %v660, %v659
    %677 = vmatprep.subr.bf16.mxu0 0
    %678 = vmatpush1.bf16.msra.mxu0 %v339
    %679 = vmatprep.subr.bf16.mxu0 0
    %680 = vmatpush1.bf16.msra.mxu0 %v340
    %681 = vmatprep.subr.bf16.mxu0 0
    %682 = vmatpush1.bf16.msra.mxu0 %v341
    %683 = vmatprep.subr.bf16.mxu0 0
    %684 = vmatpush1.bf16.msra.mxu0 %v342
    %685 = vmatprep.subr.bf16.mxu0 0
    %686 = vmatpush1.bf16.msra.mxu0 %v343
    %687 = vmatprep.subr.bf16.mxu0 0
    %688 = vmatpush1.bf16.msra.mxu0 %v344
    %689 = vmatprep.subr.bf16.mxu0 0
    %690 = vmatpush1.bf16.msra.mxu0 %v345
    %691 = vmatprep.subr.bf16.mxu0 0
    %692 = vmatpush1.bf16.msra.mxu0 %v346
    %693 = vmatprep.subr.bf16.mxu0 0
    %694 = vmatpush1.bf16.msra.mxu0 0
    %695 = vmatprep.subr.bf16.mxu0 0
    %696 = vmatpush1.bf16.msra.mxu0 0
    %697 = vmatprep.subr.bf16.mxu0 0
    %698 = vmatpush1.bf16.msra.mxu0 0
    %699 = vmatprep.subr.bf16.mxu0 0
    %700 = vmatpush1.bf16.msra.mxu0 0
    %701 = vmatprep.subr.bf16.mxu0 0
    %702 = vmatpush1.bf16.msra.mxu0 0
    %703 = vmatprep.subr.bf16.mxu0 0
    %704 = vmatpush1.bf16.msra.mxu0 0
    %705 = vmatprep.subr.bf16.mxu0 0
    %706 = vmatpush1.bf16.msra.mxu0 0
    %707 = vmatprep.subr.bf16.mxu0 0
    %708 = vmatpush1.bf16.msra.mxu0 0
    %709 = vmatprep.mubr.bf16.mxu0 0
    %710 = vmatmul.mubr.bf16.gmra.mrb[0].mxu0 %v661
    %v711 = vpop.f32.mrb[0].mxu0
    %v712 = vadd.f32 %v567, %v711
    %v713 = vpop.f32.mrb[0].mxu0
    %v714 = vpop.f32.mrb[0].mxu0
    %v715 = vadd.f32 %v570, %v714
    %v716 = vpop.f32.mrb[0].mxu0
    %717 = vmatprep.mubr.bf16.mxu0 0
    %718 = vmatmul.mubr.bf16.gmra.mrb[0].mxu0 %v662
    %v719 = vpop.f32.mrb[0].mxu0
    %v720 = vadd.f32 %v575, %v719
    %v721 = vpop.f32.mrb[0].mxu0
    %v722 = vpop.f32.mrb[0].mxu0
    %v723 = vadd.f32 %v578, %v722
    %v724 = vpop.f32.mrb[0].mxu0
    %725 = vmatprep.mubr.bf16.mxu0 0
    %726 = vmatmul.mubr.bf16.gmra.mrb[0].mxu0 %v663
    %v727 = vpop.f32.mrb[0].mxu0
    %v728 = vadd.f32 %v583, %v727
    %v729 = vpop.f32.mrb[0].mxu0
    %v730 = vpop.f32.mrb[0].mxu0
    %v731 = vadd.f32 %v586, %v730
    %v732 = vpop.f32.mrb[0].mxu0
    %733 = vmatprep.mubr.bf16.mxu0 0
    %734 = vmatmul.mubr.bf16.gmra.mrb[0].mxu0 %v664
    %v735 = vpop.f32.mrb[0].mxu0
    %v736 = vadd.f32 %v591, %v735
    %v737 = vpop.f32.mrb[0].mxu0
    %v738 = vpop.f32.mrb[0].mxu0
    %v739 = vadd.f32 %v594, %v738
    %v740 = vpop.f32.mrb[0].mxu0
    %741 = vmatprep.mubr.bf16.mxu0 0
    %742 = vmatmul.mubr.bf16.gmra.mrb[0].mxu0 %v665
    %v743 = vpop.f32.mrb[0].mxu0
    %v744 = vadd.f32 %v599, %v743
    %v745 = vpop.f32.mrb[0].mxu0
    %v746 = vpop.f32.mrb[0].mxu0
    %v747 = vadd.f32 %v602, %v746
    %v748 = vpop.f32.mrb[0].mxu0
    %749 = vmatprep.mubr.bf16.mxu0 0
    %750 = vmatmul.mubr.bf16.gmra.mrb[0].mxu0 %v666
    %v751 = vpop.f32.mrb[0].mxu0
    %v752 = vadd.f32 %v607, %v751
    %v753 = vpop.f32.mrb[0].mxu0
    %v754 = vpop.f32.mrb[0].mxu0
    %v755 = vadd.f32 %v610, %v754
    %v756 = vpop.f32.mrb[0].mxu0
    %757 = vmatprep.mubr.bf16.mxu0 0
    %758 = vmatmul.mubr.bf16.gmra.mrb[0].mxu0 %v667
    %v759 = vpop.f32.mrb[0].mxu0
    %v760 = vadd.f32 %v615, %v759
    %v761 = vpop.f32.mrb[0].mxu0
    %v762 = vpop.f32.mrb[0].mxu0
    %v763 = vadd.f32 %v618, %v762
    %v764 = vpop.f32.mrb[0].mxu0
    %765 = vmatprep.mubr.bf16.mxu0 0
    %766 = vmatmul.mubr.bf16.gmra.mrb[0].mxu0 %v668
    %v767 = vpop.f32.mrb[0].mxu0
    %v768 = vadd.f32 %v623, %v767
    %v769 = vpop.f32.mrb[0].mxu0
    %v770 = vpop.f32.mrb[0].mxu0
    %v771 = vadd.f32 %v626, %v770
    %v772 = vpop.f32.mrb[0].mxu0
    %773 = vdwg.mxu0
    %v774 = vld [vmem:[%s5] sm:$0xff]
    %v775 = vld [vmem:[%s5 + $0x8] sm:$0xff]
    %v776 = vld [vmem:[%s5 + $0x10] sm:$0xff]
    %v777 = vld [vmem:[%s5 + $0x18] sm:$0xff]
    %v778 = vld [vmem:[%s5 + $0x20] sm:$0xff]
    %v779 = vld [vmem:[%s5 + $0x28] sm:$0xff]
    %v780 = vld [vmem:[%s5 + $0x30] sm:$0xff]
    %v781 = vld [vmem:[%s5 + $0x38] sm:$0xff]
    %v782 = vld [vmem:[%s5 + $0x40] sm:$0xff]
    %v783 = vld [vmem:[%s5 + $0x48] sm:$0xff]
    %v784 = vld [vmem:[%s5 + $0x50] sm:$0xff]
    %v785 = vld [vmem:[%s5 + $0x58] sm:$0xff]
    %v786 = vld [vmem:[%s5 + $0x60] sm:$0xff]
    %v787 = vld [vmem:[%s5 + $0x68] sm:$0xff]
    %v788 = vld [vmem:[%s5 + $0x70] sm:$0xff]
    %v789 = vld [vmem:[%s5 + $0x78] sm:$0xff]
    %791 = vset.pattern.permute.xlu0 0
    %792 = vperm.xlu0 %791, %v774
    %v793 = vpop.permute.xlu0 %792
    %796 = vset.pattern.permute.xlu0 0
    %797 = vperm.xlu0 %796, %v775
    %v798 = vpop.permute.xlu0 %797
    %801 = vset.pattern.permute.xlu0 0
    %802 = vperm.xlu0 %801, %v776
    %v803 = vpop.permute.xlu0 %802
    %806 = vset.pattern.permute.xlu0 0
    %807 = vperm.xlu0 %806, %v777
    %v808 = vpop.permute.xlu0 %807
    %811 = vset.pattern.permute.xlu0 0
    %812 = vperm.xlu0 %811, %v778
    %v813 = vpop.permute.xlu0 %812
    %816 = vset.pattern.permute.xlu0 0
    %817 = vperm.xlu0 %816, %v779
    %v818 = vpop.permute.xlu0 %817
    %821 = vset.pattern.permute.xlu0 0
    %822 = vperm.xlu0 %821, %v780
    %v823 = vpop.permute.xlu0 %822
    %826 = vset.pattern.permute.xlu0 0
    %827 = vperm.xlu0 %826, %v781
    %v828 = vpop.permute.xlu0 %827
    %831 = vset.pattern.permute.xlu0 0
    %832 = vperm.xlu0 %831, %v782
    %v833 = vpop.permute.xlu0 %832
    %836 = vset.pattern.permute.xlu0 0
    %837 = vperm.xlu0 %836, %v783
    %v838 = vpop.permute.xlu0 %837
    %841 = vset.pattern.permute.xlu0 0
    %842 = vperm.xlu0 %841, %v784
    %v843 = vpop.permute.xlu0 %842
    %846 = vset.pattern.permute.xlu0 0
    %847 = vperm.xlu0 %846, %v785
    %v848 = vpop.permute.xlu0 %847
    %851 = vset.pattern.permute.xlu0 0
    %852 = vperm.xlu0 %851, %v786
    %v853 = vpop.permute.xlu0 %852
    %856 = vset.pattern.permute.xlu0 0
    %857 = vperm.xlu0 %856, %v787
    %v858 = vpop.permute.xlu0 %857
    %861 = vset.pattern.permute.xlu0 0
    %862 = vperm.xlu0 %861, %v788
    %v863 = vpop.permute.xlu0 %862
    %866 = vset.pattern.permute.xlu0 0
    %867 = vperm.xlu0 %866, %v789
    %v868 = vpop.permute.xlu0 %867
    %v870 = vadd.f32 %v712, %v793
    %v871 = vadd.f32 %v715, %v798
    %v872 = vadd.f32 %v720, %v803
    %v873 = vadd.f32 %v723, %v808
    %v874 = vadd.f32 %v728, %v813
    %v875 = vadd.f32 %v731, %v818
    %v876 = vadd.f32 %v736, %v823
    %v877 = vadd.f32 %v739, %v828
    %v878 = vadd.f32 %v744, %v833
    %v879 = vadd.f32 %v747, %v838
    %v880 = vadd.f32 %v752, %v843
    %v881 = vadd.f32 %v755, %v848
    %v882 = vadd.f32 %v760, %v853
    %v883 = vadd.f32 %v763, %v858
    %v884 = vadd.f32 %v768, %v863
    %v885 = vadd.f32 %v771, %v868
    %v886 = vmax.f32 %v870, 0.0
    %v887 = vmax.f32 %v871, 0.0
    %v888 = vmax.f32 %v872, 0.0
    %v889 = vmax.f32 %v873, 0.0
    %v890 = vmax.f32 %v874, 0.0
    %v891 = vmax.f32 %v875, 0.0
    %v892 = vmax.f32 %v876, 0.0
    %v893 = vmax.f32 %v877, 0.0
    %v894 = vmax.f32 %v878, 0.0
    %v895 = vmax.f32 %v879, 0.0
    %v896 = vmax.f32 %v880, 0.0
    %v897 = vmax.f32 %v881, 0.0
    %v898 = vmax.f32 %v882, 0.0
    %v899 = vmax.f32 %v883, 0.0
    %v900 = vmax.f32 %v884, 0.0
    %v901 = vmax.f32 %v885, 0.0
    %v902 = vld [vmem:[%s6] sm:$0xf]
    %v903 = vld [vmem:[%s6 + $0x4] sm:$0xf]
    %v904 = vld [vmem:[%s6 + $0x8] sm:$0xf]
    %v905 = vld [vmem:[%s6 + $0xc] sm:$0xf]
    %v906 = vld [vmem:[%s6 + $0x10] sm:$0xf]
    %v907 = vld [vmem:[%s6 + $0x14] sm:$0xf]
    %v908 = vld [vmem:[%s6 + $0x18] sm:$0xf]
    %v909 = vld [vmem:[%s6 + $0x1c] sm:$0xf]
    %v910 = vld [vmem:[%s6 + $0x20] sm:$0xf]
    %v911 = vld [vmem:[%s6 + $0x24] sm:$0xf]
    %v912 = vld [vmem:[%s6 + $0x28] sm:$0xf]
    %v913 = vld [vmem:[%s6 + $0x2c] sm:$0xf]
    %v914 = vld [vmem:[%s6 + $0x30] sm:$0xf]
    %v915 = vld [vmem:[%s6 + $0x34] sm:$0xf]
    %v916 = vld [vmem:[%s6 + $0x38] sm:$0xf]
    %v917 = vld [vmem:[%s6 + $0x3c] sm:$0xf]
    %v918 = vpack.c.bf16 %v887, %v886
    %v919 = vpack.c.bf16 %v889, %v888
    %v920 = vpack.c.bf16 %v891, %v890
    %v921 = vpack.c.bf16 %v893, %v892
    %v922 = vpack.c.bf16 %v895, %v894
    %v923 = vpack.c.bf16 %v897, %v896
    %v924 = vpack.c.bf16 %v899, %v898
    %v925 = vpack.c.bf16 %v901, %v900
    %v926 = vld [vmem:[%s7] sm:$0xff]
    %v927 = vld [vmem:[%s7 + $0x8] sm:$0xff]
    %v928 = vld [vmem:[%s7 + $0x10] sm:$0xff]
    %v929 = vld [vmem:[%s7 + $0x18] sm:$0xff]
    %v930 = vld [vmem:[%s7 + $0x20] sm:$0xff]
    %v931 = vld [vmem:[%s7 + $0x28] sm:$0xff]
    %v932 = vld [vmem:[%s7 + $0x30] sm:$0xff]
    %v933 = vld [vmem:[%s7 + $0x38] sm:$0xff]
    %v934 = vld [vmem:[%s7 + $0x40] sm:$0xff]
    %v935 = vld [vmem:[%s7 + $0x48] sm:$0xff]
    %v936 = vld [vmem:[%s7 + $0x50] sm:$0xff]
    %v937 = vld [vmem:[%s7 + $0x58] sm:$0xff]
    %v938 = vld [vmem:[%s7 + $0x60] sm:$0xff]
    %v939 = vld [vmem:[%s7 + $0x68] sm:$0xff]
    %v940 = vld [vmem:[%s7 + $0x70] sm:$0xff]
    %v941 = vld [vmem:[%s7 + $0x78] sm:$0xff]
    %943 = vset.pattern.permute.xlu0 0
    %944 = vperm.xlu0 %943, %v926
    %v945 = vpop.permute.xlu0 %944
    %948 = vset.pattern.permute.xlu0 0
    %949 = vperm.xlu0 %948, %v927
    %v950 = vpop.permute.xlu0 %949
    %953 = vset.pattern.permute.xlu0 0
    %954 = vperm.xlu0 %953, %v928
    %v955 = vpop.permute.xlu0 %954
    %958 = vset.pattern.permute.xlu0 0
    %959 = vperm.xlu0 %958, %v929
    %v960 = vpop.permute.xlu0 %959
    %963 = vset.pattern.permute.xlu0 0
    %964 = vperm.xlu0 %963, %v930
    %v965 = vpop.permute.xlu0 %964
    %968 = vset.pattern.permute.xlu0 0
    %969 = vperm.xlu0 %968, %v931
    %v970 = vpop.permute.xlu0 %969
    %973 = vset.pattern.permute.xlu0 0
    %974 = vperm.xlu0 %973, %v932
    %v975 = vpop.permute.xlu0 %974
    %978 = vset.pattern.permute.xlu0 0
    %979 = vperm.xlu0 %978, %v933
    %v980 = vpop.permute.xlu0 %979
    %983 = vset.pattern.permute.xlu0 0
    %984 = vperm.xlu0 %983, %v934
    %v985 = vpop.permute.xlu0 %984
    %988 = vset.pattern.permute.xlu0 0
    %989 = vperm.xlu0 %988, %v935
    %v990 = vpop.permute.xlu0 %989
    %993 = vset.pattern.permute.xlu0 0
    %994 = vperm.xlu0 %993, %v936
    %v995 = vpop.permute.xlu0 %994
    %998 = vset.pattern.permute.xlu0 0
    %999 = vperm.xlu0 %998, %v937
    %v1000 = vpop.permute.xlu0 %999
    %1003 = vset.pattern.permute.xlu0 0
    %1004 = vperm.xlu0 %1003, %v938
    %v1005 = vpop.permute.xlu0 %1004
    %1008 = vset.pattern.permute.xlu0 0
    %1009 = vperm.xlu0 %1008, %v939
    %v1010 = vpop.permute.xlu0 %1009
    %1013 = vset.pattern.permute.xlu0 0
    %1014 = vperm.xlu0 %1013, %v940
    %v1015 = vpop.permute.xlu0 %1014
    %1018 = vset.pattern.permute.xlu0 0
    %1019 = vperm.xlu0 %1018, %v941
    %v1020 = vpop.permute.xlu0 %1019
    %v1038 = vunpack.c.l.b16 %v902
    %v1039 = vunpack.c.l.b16 %v903
    %v1040 = vunpack.c.l.b16 %v904
    %v1041 = vunpack.c.l.b16 %v905
    %v1042 = vunpack.c.l.b16 %v906
    %v1043 = vunpack.c.l.b16 %v907
    %v1044 = vunpack.c.l.b16 %v908
    %v1045 = vunpack.c.l.b16 %v909
    %v1046 = vunpack.c.l.b16 %v910
    %v1047 = vunpack.c.l.b16 %v911
    %v1048 = vunpack.c.l.b16 %v912
    %v1049 = vunpack.c.l.b16 %v913
    %v1050 = vunpack.c.l.b16 %v914
    %v1051 = vunpack.c.l.b16 %v915
    %v1052 = vunpack.c.l.b16 %v916
    %v1053 = vunpack.c.l.b16 %v917
    %v1054 = vpack.c.b16 %v1039, %v1038
    %v1055 = vpack.c.b16 %v1041, %v1040
    %v1056 = vpack.c.b16 %v1043, %v1042
    %v1057 = vpack.c.b16 %v1045, %v1044
    %v1058 = vpack.c.b16 %v1047, %v1046
    %v1059 = vpack.c.b16 %v1049, %v1048
    %v1060 = vpack.c.b16 %v1051, %v1050
    %v1061 = vpack.c.b16 %v1053, %v1052
    %1070 = vmatprep.subr.bf16.mxu0 0
    %1071 = vmatpush1.bf16.msra.mxu0 %v918
    %1072 = vmatprep.subr.bf16.mxu0 0
    %1073 = vmatpush1.bf16.msra.mxu0 %v919
    %1074 = vmatprep.subr.bf16.mxu0 0
    %1075 = vmatpush1.bf16.msra.mxu0 %v920
    %1076 = vmatprep.subr.bf16.mxu0 0
    %1077 = vmatpush1.bf16.msra.mxu0 %v921
    %1078 = vmatprep.subr.bf16.mxu0 0
    %1079 = vmatpush1.bf16.msra.mxu0 %v922
    %1080 = vmatprep.subr.bf16.mxu0 0
    %1081 = vmatpush1.bf16.msra.mxu0 %v923
    %1082 = vmatprep.subr.bf16.mxu0 0
    %1083 = vmatpush1.bf16.msra.mxu0 %v924
    %1084 = vmatprep.subr.bf16.mxu0 0
    %1085 = vmatpush1.bf16.msra.mxu0 %v925
    %1086 = vmatprep.subr.bf16.mxu0 0
    %1087 = vmatpush1.bf16.msra.mxu0 0
    %1088 = vmatprep.subr.bf16.mxu0 0
    %1089 = vmatpush1.bf16.msra.mxu0 0
    %1090 = vmatprep.subr.bf16.mxu0 0
    %1091 = vmatpush1.bf16.msra.mxu0 0
    %1092 = vmatprep.subr.bf16.mxu0 0
    %1093 = vmatpush1.bf16.msra.mxu0 0
    %1094 = vmatprep.subr.bf16.mxu0 0
    %1095 = vmatpush1.bf16.msra.mxu0 0
    %1096 = vmatprep.subr.bf16.mxu0 0
    %1097 = vmatpush1.bf16.msra.mxu0 0
    %1098 = vmatprep.subr.bf16.mxu0 0
    %1099 = vmatpush1.bf16.msra.mxu0 0
    %1100 = vmatprep.subr.bf16.mxu0 0
    %1101 = vmatpush1.bf16.msra.mxu0 0
    %1102 = vmatprep.mubr.bf16.mxu0 0
    %1103 = vmatmul.mubr.bf16.gmra.mrb[0].mxu0 %v1054
    %v1104 = vpop.f32.mrb[0].mxu0
    %v1105 = vadd.f32 %v945, %v1104
    %v1106 = vpop.f32.mrb[0].mxu0
    %v1107 = vpop.f32.mrb[0].mxu0
    %v1108 = vadd.f32 %v950, %v1107
    %v1109 = vpop.f32.mrb[0].mxu0
    %1110 = vmatprep.mubr.bf16.mxu0 0
    %1111 = vmatmul.mubr.bf16.gmra.mrb[0].mxu0 %v1055
    %v1112 = vpop.f32.mrb[0].mxu0
    %v1113 = vadd.f32 %v955, %v1112
    %v1114 = vpop.f32.mrb[0].mxu0
    %v1115 = vpop.f32.mrb[0].mxu0
    %v1116 = vadd.f32 %v960, %v1115
    %v1117 = vpop.f32.mrb[0].mxu0
    %1118 = vmatprep.mubr.bf16.mxu0 0
    %1119 = vmatmul.mubr.bf16.gmra.mrb[0].mxu0 %v1056
    %v1120 = vpop.f32.mrb[0].mxu0
    %v1121 = vadd.f32 %v965, %v1120
    %v1122 = vpop.f32.mrb[0].mxu0
    %v1123 = vpop.f32.mrb[0].mxu0
    %v1124 = vadd.f32 %v970, %v1123
    %v1125 = vpop.f32.mrb[0].mxu0
    %1126 = vmatprep.mubr.bf16.mxu0 0
    %1127 = vmatmul.mubr.bf16.gmra.mrb[0].mxu0 %v1057
    %v1128 = vpop.f32.mrb[0].mxu0
    %v1129 = vadd.f32 %v975, %v1128
    %v1130 = vpop.f32.mrb[0].mxu0
    %v1131 = vpop.f32.mrb[0].mxu0
    %v1132 = vadd.f32 %v980, %v1131
    %v1133 = vpop.f32.mrb[0].mxu0
    %1134 = vmatprep.mubr.bf16.mxu0 0
    %1135 = vmatmul.mubr.bf16.gmra.mrb[0].mxu0 %v1058
    %v1136 = vpop.f32.mrb[0].mxu0
    %v1137 = vadd.f32 %v985, %v1136
    %v1138 = vpop.f32.mrb[0].mxu0
    %v1139 = vpop.f32.mrb[0].mxu0
    %v1140 = vadd.f32 %v990, %v1139
    %v1141 = vpop.f32.mrb[0].mxu0
    %1142 = vmatprep.mubr.bf16.mxu0 0
    %1143 = vmatmul.mubr.bf16.gmra.mrb[0].mxu0 %v1059
    %v1144 = vpop.f32.mrb[0].mxu0
    %v1145 = vadd.f32 %v995, %v1144
    %v1146 = vpop.f32.mrb[0].mxu0
    %v1147 = vpop.f32.mrb[0].mxu0
    %v1148 = vadd.f32 %v1000, %v1147
    %v1149 = vpop.f32.mrb[0].mxu0
    %1150 = vmatprep.mubr.bf16.mxu0 0
    %1151 = vmatmul.mubr.bf16.gmra.mrb[0].mxu0 %v1060
    %v1152 = vpop.f32.mrb[0].mxu0
    %v1153 = vadd.f32 %v1005, %v1152
    %v1154 = vpop.f32.mrb[0].mxu0
    %v1155 = vpop.f32.mrb[0].mxu0
    %v1156 = vadd.f32 %v1010, %v1155
    %v1157 = vpop.f32.mrb[0].mxu0
    %1158 = vmatprep.mubr.bf16.mxu0 0
    %1159 = vmatmul.mubr.bf16.gmra.mrb[0].mxu0 %v1061
    %v1160 = vpop.f32.mrb[0].mxu0
    %v1161 = vadd.f32 %v1015, %v1160
    %v1162 = vpop.f32.mrb[0].mxu0
    %v1163 = vpop.f32.mrb[0].mxu0
    %v1164 = vadd.f32 %v1020, %v1163
    %v1165 = vpop.f32.mrb[0].mxu0
    %1166 = vdwg.mxu0
    %v1167 = vmax.f32 %v1105, 0.0
    %v1168 = vmax.f32 %v1108, 0.0
    %v1169 = vmax.f32 %v1113, 0.0
    %v1170 = vmax.f32 %v1116, 0.0
    %v1171 = vmax.f32 %v1121, 0.0
    %v1172 = vmax.f32 %v1124, 0.0
    %v1173 = vmax.f32 %v1129, 0.0
    %v1174 = vmax.f32 %v1132, 0.0
    %v1175 = vmax.f32 %v1137, 0.0
    %v1176 = vmax.f32 %v1140, 0.0
    %v1177 = vmax.f32 %v1145, 0.0
    %v1178 = vmax.f32 %v1148, 0.0
    %v1179 = vmax.f32 %v1153, 0.0
    %v1180 = vmax.f32 %v1156, 0.0
    %v1181 = vmax.f32 %v1161, 0.0
    %v1182 = vmax.f32 %v1164, 0.0
    %v1183 = vld [vmem:[%s8] sm:$0xff]
    %v1184 = vld [vmem:[%s8 + $0x8] sm:$0xff]
    %v1185 = vld [vmem:[%s8 + $0x10] sm:$0xff]
    %v1186 = vld [vmem:[%s8 + $0x18] sm:$0xff]
    %v1187 = vld [vmem:[%s8 + $0x20] sm:$0xff]
    %v1188 = vld [vmem:[%s8 + $0x28] sm:$0xff]
    %v1189 = vld [vmem:[%s8 + $0x30] sm:$0xff]
    %v1190 = vld [vmem:[%s8 + $0x38] sm:$0xff]
    %v1191 = vld [vmem:[%s8 + $0x40] sm:$0xff]
    %v1192 = vld [vmem:[%s8 + $0x48] sm:$0xff]
    %v1193 = vld [vmem:[%s8 + $0x50] sm:$0xff]
    %v1194 = vld [vmem:[%s8 + $0x58] sm:$0xff]
    %v1195 = vld [vmem:[%s8 + $0x60] sm:$0xff]
    %v1196 = vld [vmem:[%s8 + $0x68] sm:$0xff]
    %v1197 = vld [vmem:[%s8 + $0x70] sm:$0xff]
    %v1198 = vld [vmem:[%s8 + $0x78] sm:$0xff]
    %1200 = vset.pattern.permute.xlu0 0
    %1201 = vperm.xlu0 %1200, %v1183
    %v1202 = vpop.permute.xlu0 %1201
    %1205 = vset.pattern.permute.xlu0 0
    %1206 = vperm.xlu0 %1205, %v1184
    %v1207 = vpop.permute.xlu0 %1206
    %1210 = vset.pattern.permute.xlu0 0
    %1211 = vperm.xlu0 %1210, %v1185
    %v1212 = vpop.permute.xlu0 %1211
    %1215 = vset.pattern.permute.xlu0 0
    %1216 = vperm.xlu0 %1215, %v1186
    %v1217 = vpop.permute.xlu0 %1216
    %1220 = vset.pattern.permute.xlu0 0
    %1221 = vperm.xlu0 %1220, %v1187
    %v1222 = vpop.permute.xlu0 %1221
    %1225 = vset.pattern.permute.xlu0 0
    %1226 = vperm.xlu0 %1225, %v1188
    %v1227 = vpop.permute.xlu0 %1226
    %1230 = vset.pattern.permute.xlu0 0
    %1231 = vperm.xlu0 %1230, %v1189
    %v1232 = vpop.permute.xlu0 %1231
    %1235 = vset.pattern.permute.xlu0 0
    %1236 = vperm.xlu0 %1235, %v1190
    %v1237 = vpop.permute.xlu0 %1236
    %1240 = vset.pattern.permute.xlu0 0
    %1241 = vperm.xlu0 %1240, %v1191
    %v1242 = vpop.permute.xlu0 %1241
    %1245 = vset.pattern.permute.xlu0 0
    %1246 = vperm.xlu0 %1245, %v1192
    %v1247 = vpop.permute.xlu0 %1246
    %1250 = vset.pattern.permute.xlu0 0
    %1251 = vperm.xlu0 %1250, %v1193
    %v1252 = vpop.permute.xlu0 %1251
    %1255 = vset.pattern.permute.xlu0 0
    %1256 = vperm.xlu0 %1255, %v1194
    %v1257 = vpop.permute.xlu0 %1256
    %1260 = vset.pattern.permute.xlu0 0
    %1261 = vperm.xlu0 %1260, %v1195
    %v1262 = vpop.permute.xlu0 %1261
    %1265 = vset.pattern.permute.xlu0 0
    %1266 = vperm.xlu0 %1265, %v1196
    %v1267 = vpop.permute.xlu0 %1266
    %1270 = vset.pattern.permute.xlu0 0
    %1271 = vperm.xlu0 %1270, %v1197
    %v1272 = vpop.permute.xlu0 %1271
    %1275 = vset.pattern.permute.xlu0 0
    %1276 = vperm.xlu0 %1275, %v1198
    %v1277 = vpop.permute.xlu0 %1276
    %v1279 = vmul.f32 %v1167, %v1202
    %v1280 = vmul.f32 %v1168, %v1207
    %v1281 = vmul.f32 %v1169, %v1212
    %v1282 = vmul.f32 %v1170, %v1217
    %v1283 = vmul.f32 %v1171, %v1222
    %v1284 = vmul.f32 %v1172, %v1227
    %v1285 = vmul.f32 %v1173, %v1232
    %v1286 = vmul.f32 %v1174, %v1237
    %v1287 = vmul.f32 %v1175, %v1242
    %v1288 = vmul.f32 %v1176, %v1247
    %v1289 = vmul.f32 %v1177, %v1252
    %v1290 = vmul.f32 %v1178, %v1257
    %v1291 = vmul.f32 %v1179, %v1262
    %v1292 = vmul.f32 %v1180, %v1267
    %v1293 = vmul.f32 %v1181, %v1272
    %v1294 = vmul.f32 %v1182, %v1277
    %v1295 = vadd.f32 %v1279, %v1280
    %v1296 = vadd.f32 %v1295, %v1281
    %v1297 = vadd.f32 %v1296, %v1282
    %v1298 = vadd.f32 %v1297, %v1283
    %v1299 = vadd.f32 %v1298, %v1284
    %v1300 = vadd.f32 %v1299, %v1285
    %v1301 = vadd.f32 %v1300, %v1286
    %v1302 = vadd.f32 %v1301, %v1287
    %v1303 = vadd.f32 %v1302, %v1288
    %v1304 = vadd.f32 %v1303, %v1289
    %v1305 = vadd.f32 %v1304, %v1290
    %v1306 = vadd.f32 %v1305, %v1291
    %v1307 = vadd.f32 %v1306, %v1292
    %v1308 = vadd.f32 %v1307, %v1293
    %v1309 = vadd.f32 %v1308, %v1294
    %v1310 = vrot.slane %v1309, 4
    %v1311 = vadd.f32 %v1309, %v1310
    %v1312 = vrot.slane %v1311, 2
    %v1313 = vadd.f32 %v1311, %v1312
    %v1314 = vrot.slane %v1313, 1
    %v1315 = vadd.f32 %v1313, %v1314
    %v1316 = vld [vmem:[#allocation2] sm:$0x1]
    %1318 = vset.pattern.permute.xlu0 0
    %1319 = vperm.xlu0 %1318, %v1316
    %v1320 = vpop.permute.xlu0 %1319
    %v1322 = vlaneseq
    %v1323 = vshrl.u32 %v1322, 7
    %v1324 = vsub.s32 0, %v1323
    %v1325 = vrot.slane %v1320, %v1324
    %v1326 = vadd.f32 %v1315, %v1325
    %1327 = vst [vmem:[#allocation3] sm:$0x1] %v1326
    // Predicated region
    $region42: #{tpu_custom_call.1} parent=1 // pred_check
      _
    $region43: #{tpu_custom_call.1} parent=1 // pred_check_branch
      %1329 = sbr.rel (0) target = $region45
    $region44: #{tpu_custom_call.1} parent=1 // pred_region
      %s1331 = ssub.s32 16, 16
      %1332 = vsyncadd [#allocation4], %s1331
      %s1334 = sshll.u32 [#allocation3], 4
      %s1335 = int_to_ptr.vmem [resolvable:$true] %s1334
      %1337 = dma.vmem_to_hbm [thread:$0]  %s1335, 16, %s10, [#allocation4]
    $region45: #{tpu_custom_call.1} parent=1 // pred_fallthru
      _
    // Predicated region
    $region46: #{tpu_custom_call.1} parent=1 // pred_check
      _
    $region47: #{tpu_custom_call.1} parent=1 // pred_check_branch
      %1339 = sbr.rel (0) target = $region49
    $region48: #{tpu_custom_call.1} parent=1 // pred_region
      %1340 = dma.done [#allocation4], 16
    $region49: #{tpu_custom_call.1} parent=1 // pred_fallthru
      _
    %1341 = vsyncpa [#allocation4], 1

// kernel: tpu_custom_call.1
$region0: #{tpu_custom_call.1}
  #allocation0 [shape = 'u32[]', space=smem, size = 0x4, offset = 0x4, fixed_abs, tag = 'smem constant byte address 0x4 - core index']
  #allocation1 [shape = 'u32[144,128]{1,0:T(1,128)}', space=vmem, size = 0x12000, scoped, tag = 'internal scratch']
  #allocation2 [shape = 'f32[1,1]{1,0:T(1,128)S(1)}', space=vmem, size = 0x200, scoped, tag = 'scoped memory for tpu_custom_call.1']
  %s0 = inlined_call_operand.vmem [shape: s32[1,128], index: 0, kind: input, shape index: {}]
  %s1 = inlined_call_operand.vmem [shape: s32[1,128], index: 1, kind: input, shape index: {}]
  %s2 = inlined_call_operand.vmem [shape: bf16[128,128], index: 2, kind: input, shape index: {}]
  %s3 = inlined_call_operand.vmem [shape: bf16[128,128], index: 3, kind: input, shape index: {}]
  %s4 = inlined_call_operand.vmem [shape: bf16[128,128], index: 4, kind: input, shape index: {}]
  %s5 = inlined_call_operand.vmem [shape: f32[128,1], index: 5, kind: input, shape index: {}]
  %s6 = inlined_call_operand.vmem [shape: bf16[128,128], index: 6, kind: input, shape index: {}]
  %s7 = inlined_call_operand.vmem [shape: f32[128,1], index: 7, kind: input, shape index: {}]
  %s8 = inlined_call_operand.vmem [shape: f32[128,1], index: 8, kind: input, shape index: {}]
  %s9 = inlined_call_operand.<no memory space> [shape: f32[1,1], index: 9, kind: input, shape index: {}]
  %s10 = inlined_call_operand.hbm [shape: f32[1,128], index: 10, kind: output, shape index: {}]
  %s11 = sld [smem:[#allocation0]]
  $region50: #{tpu_custom_call.1} parent=0
    _
  %s13 = ssub.s32 1, %s11
  %s14 = scalar_select 0, %s13, %s11
  %v15 = vstv %s9
  %16 = vst [vmem:[#allocation2] sm:$0x1] %v15
  $region1: #{tpu_custom_call.1} parent=0
    #allocation3 [shape = 'u8[512]{0}', space=vmem, size = 0x400, scoped, tag = 'output window, operand 0, single buffered']
    #allocation4 [shape = 's32[1]{0}', space=sflag, size = 0x4, scoped, tag = 'scoped memory for tpu_custom_call.1']
    %17 = vsyncpa [#allocation4], 0
    // Predicated region
    $region2: #{tpu_custom_call.1} parent=1 // pred_check
      _
    $region3: #{tpu_custom_call.1} parent=1 // pred_check_branch
      %19 = sbr.rel (0) target = $region5
    $region4: #{tpu_custom_call.1} parent=1 // pred_region
      _
    $region5: #{tpu_custom_call.1} parent=1 // pred_fallthru
      _
    // Predicated region
    $region6: #{tpu_custom_call.1} parent=1 // pred_check
      _
    $region7: #{tpu_custom_call.1} parent=1 // pred_check_branch
      %21 = sbr.rel (0) target = $region9
    $region8: #{tpu_custom_call.1} parent=1 // pred_region
      _
    $region9: #{tpu_custom_call.1} parent=1 // pred_fallthru
      _
    // Predicated region
    $region10: #{tpu_custom_call.1} parent=1 // pred_check
      _
    $region11: #{tpu_custom_call.1} parent=1 // pred_check_branch
      %23 = sbr.rel (0) target = $region13
    $region12: #{tpu_custom_call.1} parent=1 // pred_region
      _
    $region13: #{tpu_custom_call.1} parent=1 // pred_fallthru
      _
    // Predicated region
    $region14: #{tpu_custom_call.1} parent=1 // pred_check
      _
    $region15: #{tpu_custom_call.1} parent=1 // pred_check_branch
      %25 = sbr.rel (0) target = $region17
    $region16: #{tpu_custom_call.1} parent=1 // pred_region
      _
    $region17: #{tpu_custom_call.1} parent=1 // pred_fallthru
      _
    // Predicated region
    $region18: #{tpu_custom_call.1} parent=1 // pred_check
      _
    $region19: #{tpu_custom_call.1} parent=1 // pred_check_branch
      %27 = sbr.rel (0) target = $region21
    $region20: #{tpu_custom_call.1} parent=1 // pred_region
      _
    $region21: #{tpu_custom_call.1} parent=1 // pred_fallthru
      _
    // Predicated region
    $region22: #{tpu_custom_call.1} parent=1 // pred_check
      _
    $region23: #{tpu_custom_call.1} parent=1 // pred_check_branch
      %29 = sbr.rel (0) target = $region25
    $region24: #{tpu_custom_call.1} parent=1 // pred_region
      _
    $region25: #{tpu_custom_call.1} parent=1 // pred_fallthru
      _
    // Predicated region
    $region26: #{tpu_custom_call.1} parent=1 // pred_check
      _
    $region27: #{tpu_custom_call.1} parent=1 // pred_check_branch
      %31 = sbr.rel (0) target = $region29
    $region28: #{tpu_custom_call.1} parent=1 // pred_region
      _
    $region29: #{tpu_custom_call.1} parent=1 // pred_fallthru
      _
    // Predicated region
    $region30: #{tpu_custom_call.1} parent=1 // pred_check
      _
    $region31: #{tpu_custom_call.1} parent=1 // pred_check_branch
      %33 = sbr.rel (0) target = $region33
    $region32: #{tpu_custom_call.1} parent=1 // pred_region
      _
    $region33: #{tpu_custom_call.1} parent=1 // pred_fallthru
      _
    // Predicated region
    $region34: #{tpu_custom_call.1} parent=1 // pred_check
      _
    $region35: #{tpu_custom_call.1} parent=1 // pred_check_branch
      %35 = sbr.rel (0) target = $region37
    $region36: #{tpu_custom_call.1} parent=1 // pred_region
      _
    $region37: #{tpu_custom_call.1} parent=1 // pred_fallthru
      _
    // Predicated region
    $region38: #{tpu_custom_call.1} parent=1 // pred_check
      _
    $region39: #{tpu_custom_call.1} parent=1 // pred_check_branch
      %37 = sbr.rel (0) target = $region41
    $region40: #{tpu_custom_call.1} parent=1 // pred_region
      _
    $region41: #{tpu_custom_call.1} parent=1 // pred_fallthru
      _
    %v39 = vlaneseq
    %v40 = vshrl.u32 %v39, 7
    %v41 = vadd.s32 %v40, 8
    %v42 = vadd.s32 %v40, 16
    %v43 = vadd.s32 %v40, 24
    %v44 = vadd.s32 %v40, 32
    %v45 = vadd.s32 %v40, 40
    %v46 = vadd.s32 %v40, 48
    %v47 = vadd.s32 %v40, 56
    %v48 = vadd.s32 %v40, 64
    %v49 = vadd.s32 %v40, 72
    %v50 = vadd.s32 %v40, 80
    %v51 = vadd.s32 %v40, 88
    %v52 = vadd.s32 %v40, 96
    %v53 = vadd.s32 %v40, 104
    %v54 = vadd.s32 %v40, 112
    %v55 = vadd.s32 %v40, 120
    %v56 = vld [vmem:[%s2] sm:$0xf]
    %v57 = vld [vmem:[%s2 + $0x4] sm:$0xf]
    %v58 = vld [vmem:[%s2 + $0x8] sm:$0xf]
    %v59 = vld [vmem:[%s2 + $0xc] sm:$0xf]
    %v60 = vld [vmem:[%s2 + $0x10] sm:$0xf]
    %v61 = vld [vmem:[%s2 + $0x14] sm:$0xf]
    %v62 = vld [vmem:[%s2 + $0x18] sm:$0xf]
    %v63 = vld [vmem:[%s2 + $0x1c] sm:$0xf]
    %v64 = vld [vmem:[%s2 + $0x20] sm:$0xf]
    %v65 = vld [vmem:[%s2 + $0x24] sm:$0xf]
    %v66 = vld [vmem:[%s2 + $0x28] sm:$0xf]
    %v67 = vld [vmem:[%s2 + $0x2c] sm:$0xf]
    %v68 = vld [vmem:[%s2 + $0x30] sm:$0xf]
    %v69 = vld [vmem:[%s2 + $0x34] sm:$0xf]
    %v70 = vld [vmem:[%s2 + $0x38] sm:$0xf]
    %v71 = vld [vmem:[%s2 + $0x3c] sm:$0xf]
    %v72 = vld [vmem:[%s0] sm:$0x1]
    %v73 = vlaneseq
    %v74 = vshrl.u32 %v73, 7
    %v75 = vsub.s32 0, %v74
    %v76 = vrot.slane %v72, %v75
    %vm77 = vcmp.eq.s32.totalorder %v40, %v76
    %vm78 = vcmp.eq.s32.totalorder %v41, %v76
    %vm79 = vcmp.eq.s32.totalorder %v42, %v76
    %vm80 = vcmp.eq.s32.totalorder %v43, %v76
    %vm81 = vcmp.eq.s32.totalorder %v44, %v76
    %vm82 = vcmp.eq.s32.totalorder %v45, %v76
    %vm83 = vcmp.eq.s32.totalorder %v46, %v76
    %vm84 = vcmp.eq.s32.totalorder %v47, %v76
    %vm85 = vcmp.eq.s32.totalorder %v48, %v76
    %vm86 = vcmp.eq.s32.totalorder %v49, %v76
    %vm87 = vcmp.eq.s32.totalorder %v50, %v76
    %vm88 = vcmp.eq.s32.totalorder %v51, %v76
    %vm89 = vcmp.eq.s32.totalorder %v52, %v76
    %vm90 = vcmp.eq.s32.totalorder %v53, %v76
    %vm91 = vcmp.eq.s32.totalorder %v54, %v76
    %vm92 = vcmp.eq.s32.totalorder %v55, %v76
    %v93 = vsel %vm77, 1, 0
    %v94 = vsel %vm78, 1, 0
    %v95 = vsel %vm79, 1, 0
    %v96 = vsel %vm80, 1, 0
    %v97 = vsel %vm81, 1, 0
    %v98 = vsel %vm82, 1, 0
    %v99 = vsel %vm83, 1, 0
    %v100 = vsel %vm84, 1, 0
    %v101 = vsel %vm85, 1, 0
    %v102 = vsel %vm86, 1, 0
    %v103 = vsel %vm87, 1, 0
    %v104 = vsel %vm88, 1, 0
    %v105 = vsel %vm89, 1, 0
    %v106 = vsel %vm90, 1, 0
    %v107 = vsel %vm91, 1, 0
    %v108 = vsel %vm92, 1, 0
    %v109 = vcvt.s32.f32 %v93
    %v110 = vcvt.s32.f32 %v94
    %v111 = vcvt.s32.f32 %v95
    %v112 = vcvt.s32.f32 %v96
    %v113 = vcvt.s32.f32 %v97
    %v114 = vcvt.s32.f32 %v98
    %v115 = vcvt.s32.f32 %v99
    %v116 = vcvt.s32.f32 %v100
    %v117 = vcvt.s32.f32 %v101
    %v118 = vcvt.s32.f32 %v102
    %v119 = vcvt.s32.f32 %v103
    %v120 = vcvt.s32.f32 %v104
    %v121 = vcvt.s32.f32 %v105
    %v122 = vcvt.s32.f32 %v106
    %v123 = vcvt.s32.f32 %v107
    %v124 = vcvt.s32.f32 %v108
    %v125 = vpack.c.bf16 %v110, %v109
    %v126 = vpack.c.bf16 %v112, %v111
    %v127 = vpack.c.bf16 %v114, %v113
    %v128 = vpack.c.bf16 %v116, %v115
    %v129 = vpack.c.bf16 %v118, %v117
    %v130 = vpack.c.bf16 %v120, %v119
    %v131 = vpack.c.bf16 %v122, %v121
    %v132 = vpack.c.bf16 %v124, %v123
    %v133 = vld [vmem:[%s1] sm:$0x1]
    %v134 = vlaneseq
    %v135 = vshrl.u32 %v134, 7
    %v136 = vsub.s32 0, %v135
    %v137 = vrot.slane %v133, %v136
    %vm138 = vcmp.eq.s32.totalorder %v40, %v137
    %vm139 = vcmp.eq.s32.totalorder %v41, %v137
    %vm140 = vcmp.eq.s32.totalorder %v42, %v137
    %vm141 = vcmp.eq.s32.totalorder %v43, %v137
    %vm142 = vcmp.eq.s32.totalorder %v44, %v137
    %vm143 = vcmp.eq.s32.totalorder %v45, %v137
    %vm144 = vcmp.eq.s32.totalorder %v46, %v137
    %vm145 = vcmp.eq.s32.totalorder %v47, %v137
    %vm146 = vcmp.eq.s32.totalorder %v48, %v137
    %vm147 = vcmp.eq.s32.totalorder %v49, %v137
    %vm148 = vcmp.eq.s32.totalorder %v50, %v137
    %vm149 = vcmp.eq.s32.totalorder %v51, %v137
    %vm150 = vcmp.eq.s32.totalorder %v52, %v137
    %vm151 = vcmp.eq.s32.totalorder %v53, %v137
    %vm152 = vcmp.eq.s32.totalorder %v54, %v137
    %vm153 = vcmp.eq.s32.totalorder %v55, %v137
    %v154 = vsel %vm138, 1, 0
    %v155 = vsel %vm139, 1, 0
    %v156 = vsel %vm140, 1, 0
    %v157 = vsel %vm141, 1, 0
    %v158 = vsel %vm142, 1, 0
    %v159 = vsel %vm143, 1, 0
    %v160 = vsel %vm144, 1, 0
    %v161 = vsel %vm145, 1, 0
    %v162 = vsel %vm146, 1, 0
    %v163 = vsel %vm147, 1, 0
    %v164 = vsel %vm148, 1, 0
    %v165 = vsel %vm149, 1, 0
    %v166 = vsel %vm150, 1, 0
    %v167 = vsel %vm151, 1, 0
    %v168 = vsel %vm152, 1, 0
    %v169 = vsel %vm153, 1, 0
    %v170 = vcvt.s32.f32 %v154
    %v171 = vcvt.s32.f32 %v155
    %v172 = vcvt.s32.f32 %v156
    %v173 = vcvt.s32.f32 %v157
    %v174 = vcvt.s32.f32 %v158
    %v175 = vcvt.s32.f32 %v159
    %v176 = vcvt.s32.f32 %v160
    %v177 = vcvt.s32.f32 %v161
    %v178 = vcvt.s32.f32 %v162
    %v179 = vcvt.s32.f32 %v163
    %v180 = vcvt.s32.f32 %v164
    %v181 = vcvt.s32.f32 %v165
    %v182 = vcvt.s32.f32 %v166
    %v183 = vcvt.s32.f32 %v167
    %v184 = vcvt.s32.f32 %v168
    %v185 = vcvt.s32.f32 %v169
    %v186 = vpack.c.bf16 %v171, %v170
    %v187 = vpack.c.bf16 %v173, %v172
    %v188 = vpack.c.bf16 %v175, %v174
    %v189 = vpack.c.bf16 %v177, %v176
    %v190 = vpack.c.bf16 %v179, %v178
    %v191 = vpack.c.bf16 %v181, %v180
    %v192 = vpack.c.bf16 %v183, %v182
    %v193 = vpack.c.bf16 %v185, %v184
    %v210 = vunpack.c.l.b16 %v56
    %v211 = vunpack.c.l.b16 %v57
    %v212 = vunpack.c.l.b16 %v58
    %v213 = vunpack.c.l.b16 %v59
    %v214 = vunpack.c.l.b16 %v60
    %v215 = vunpack.c.l.b16 %v61
    %v216 = vunpack.c.l.b16 %v62
    %v217 = vunpack.c.l.b16 %v63
    %v218 = vunpack.c.l.b16 %v64
    %v219 = vunpack.c.l.b16 %v65
    %v220 = vunpack.c.l.b16 %v66
    %v221 = vunpack.c.l.b16 %v67
    %v222 = vunpack.c.l.b16 %v68
    %v223 = vunpack.c.l.b16 %v69
    %v224 = vunpack.c.l.b16 %v70
    %v225 = vunpack.c.l.b16 %v71
    %v226 = vpack.c.b16 %v211, %v210
    %v227 = vpack.c.b16 %v213, %v212
    %v228 = vpack.c.b16 %v215, %v214
    %v229 = vpack.c.b16 %v217, %v216
    %v230 = vpack.c.b16 %v219, %v218
    %v231 = vpack.c.b16 %v221, %v220
    %v232 = vpack.c.b16 %v223, %v222
    %v233 = vpack.c.b16 %v225, %v224
    %242 = vmatprep.subr.bf16.mxu0 0
    %243 = vmatpush1.bf16.msra.mxu0 %v125
    %244 = vmatprep.subr.bf16.mxu0 0
    %245 = vmatpush1.bf16.msra.mxu0 %v126
    %246 = vmatprep.subr.bf16.mxu0 0
    %247 = vmatpush1.bf16.msra.mxu0 %v127
    %248 = vmatprep.subr.bf16.mxu0 0
    %249 = vmatpush1.bf16.msra.mxu0 %v128
    %250 = vmatprep.subr.bf16.mxu0 0
    %251 = vmatpush1.bf16.msra.mxu0 %v129
    %252 = vmatprep.subr.bf16.mxu0 0
    %253 = vmatpush1.bf16.msra.mxu0 %v130
    %254 = vmatprep.subr.bf16.mxu0 0
    %255 = vmatpush1.bf16.msra.mxu0 %v131
    %256 = vmatprep.subr.bf16.mxu0 0
    %257 = vmatpush1.bf16.msra.mxu0 %v132
    %258 = vmatprep.subr.bf16.mxu0 0
    %259 = vmatpush1.bf16.msra.mxu0 0
    %260 = vmatprep.subr.bf16.mxu0 0
    %261 = vmatpush1.bf16.msra.mxu0 0
    %262 = vmatprep.subr.bf16.mxu0 0
    %263 = vmatpush1.bf16.msra.mxu0 0
    %264 = vmatprep.subr.bf16.mxu0 0
    %265 = vmatpush1.bf16.msra.mxu0 0
    %266 = vmatprep.subr.bf16.mxu0 0
    %267 = vmatpush1.bf16.msra.mxu0 0
    %268 = vmatprep.subr.bf16.mxu0 0
    %269 = vmatpush1.bf16.msra.mxu0 0
    %270 = vmatprep.subr.bf16.mxu0 0
    %271 = vmatpush1.bf16.msra.mxu0 0
    %272 = vmatprep.subr.bf16.mxu0 0
    %273 = vmatpush1.bf16.msra.mxu0 0
    %274 = vmatprep.mubr.bf16.mxu0 0
    %275 = vmatmul.mubr.bf16.gmra.mrb[0].mxu0 %v226
    %v276 = vpop.f32.mrb[0].mxu0
    %v277 = vadd.f32 0.0, %v276
    %v278 = vpop.f32.mrb[0].mxu0
    %v279 = vpop.f32.mrb[0].mxu0
    %v280 = vadd.f32 0.0, %v279
    %v281 = vpop.f32.mrb[0].mxu0
    %282 = vmatprep.mubr.bf16.mxu0 0
    %283 = vmatmul.mubr.bf16.gmra.mrb[0].mxu0 %v227
    %v284 = vpop.f32.mrb[0].mxu0
    %v285 = vadd.f32 0.0, %v284
    %v286 = vpop.f32.mrb[0].mxu0
    %v287 = vpop.f32.mrb[0].mxu0
    %v288 = vadd.f32 0.0, %v287
    %v289 = vpop.f32.mrb[0].mxu0
    %290 = vmatprep.mubr.bf16.mxu0 0
    %291 = vmatmul.mubr.bf16.gmra.mrb[0].mxu0 %v228
    %v292 = vpop.f32.mrb[0].mxu0
    %v293 = vadd.f32 0.0, %v292
    %v294 = vpop.f32.mrb[0].mxu0
    %v295 = vpop.f32.mrb[0].mxu0
    %v296 = vadd.f32 0.0, %v295
    %v297 = vpop.f32.mrb[0].mxu0
    %298 = vmatprep.mubr.bf16.mxu0 0
    %299 = vmatmul.mubr.bf16.gmra.mrb[0].mxu0 %v229
    %v300 = vpop.f32.mrb[0].mxu0
    %v301 = vadd.f32 0.0, %v300
    %v302 = vpop.f32.mrb[0].mxu0
    %v303 = vpop.f32.mrb[0].mxu0
    %v304 = vadd.f32 0.0, %v303
    %v305 = vpop.f32.mrb[0].mxu0
    %306 = vmatprep.mubr.bf16.mxu0 0
    %307 = vmatmul.mubr.bf16.gmra.mrb[0].mxu0 %v230
    %v308 = vpop.f32.mrb[0].mxu0
    %v309 = vadd.f32 0.0, %v308
    %v310 = vpop.f32.mrb[0].mxu0
    %v311 = vpop.f32.mrb[0].mxu0
    %v312 = vadd.f32 0.0, %v311
    %v313 = vpop.f32.mrb[0].mxu0
    %314 = vmatprep.mubr.bf16.mxu0 0
    %315 = vmatmul.mubr.bf16.gmra.mrb[0].mxu0 %v231
    %v316 = vpop.f32.mrb[0].mxu0
    %v317 = vadd.f32 0.0, %v316
    %v318 = vpop.f32.mrb[0].mxu0
    %v319 = vpop.f32.mrb[0].mxu0
    %v320 = vadd.f32 0.0, %v319
    %v321 = vpop.f32.mrb[0].mxu0
    %322 = vmatprep.mubr.bf16.mxu0 0
    %323 = vmatmul.mubr.bf16.gmra.mrb[0].mxu0 %v232
    %v324 = vpop.f32.mrb[0].mxu0
    %v325 = vadd.f32 0.0, %v324
    %v326 = vpop.f32.mrb[0].mxu0
    %v327 = vpop.f32.mrb[0].mxu0
    %v328 = vadd.f32 0.0, %v327
    %v329 = vpop.f32.mrb[0].mxu0
    %330 = vmatprep.mubr.bf16.mxu0 0
    %331 = vmatmul.mubr.bf16.gmra.mrb[0].mxu0 %v233
    %v332 = vpop.f32.mrb[0].mxu0
    %v333 = vadd.f32 0.0, %v332
    %v334 = vpop.f32.mrb[0].mxu0
    %v335 = vpop.f32.mrb[0].mxu0
    %v336 = vadd.f32 0.0, %v335
    %v337 = vpop.f32.mrb[0].mxu0
    %338 = vdwg.mxu0
    %v339 = vpack.c.bf16 %v280, %v277
    %v340 = vpack.c.bf16 %v288, %v285
    %v341 = vpack.c.bf16 %v296, %v293
    %v342 = vpack.c.bf16 %v304, %v301
    %v343 = vpack.c.bf16 %v312, %v309
    %v344 = vpack.c.bf16 %v320, %v317
    %v345 = vpack.c.bf16 %v328, %v325
    %v346 = vpack.c.bf16 %v336, %v333
    %347 = vmatprep.subr.bf16.mxu0 0
    %348 = vmatpush1.bf16.msra.mxu0 %v186
    %349 = vmatprep.subr.bf16.mxu0 0
    %350 = vmatpush1.bf16.msra.mxu0 %v187
    %351 = vmatprep.subr.bf16.mxu0 0
    %352 = vmatpush1.bf16.msra.mxu0 %v188
    %353 = vmatprep.subr.bf16.mxu0 0
    %354 = vmatpush1.bf16.msra.mxu0 %v189
    %355 = vmatprep.subr.bf16.mxu0 0
    %356 = vmatpush1.bf16.msra.mxu0 %v190
    %357 = vmatprep.subr.bf16.mxu0 0
    %358 = vmatpush1.bf16.msra.mxu0 %v191
    %359 = vmatprep.subr.bf16.mxu0 0
    %360 = vmatpush1.bf16.msra.mxu0 %v192
    %361 = vmatprep.subr.bf16.mxu0 0
    %362 = vmatpush1.bf16.msra.mxu0 %v193
    %363 = vmatprep.subr.bf16.mxu0 0
    %364 = vmatpush1.bf16.msra.mxu0 0
    %365 = vmatprep.subr.bf16.mxu0 0
    %366 = vmatpush1.bf16.msra.mxu0 0
    %367 = vmatprep.subr.bf16.mxu0 0
    %368 = vmatpush1.bf16.msra.mxu0 0
    %369 = vmatprep.subr.bf16.mxu0 0
    %370 = vmatpush1.bf16.msra.mxu0 0
    %371 = vmatprep.subr.bf16.mxu0 0
    %372 = vmatpush1.bf16.msra.mxu0 0
    %373 = vmatprep.subr.bf16.mxu0 0
    %374 = vmatpush1.bf16.msra.mxu0 0
    %375 = vmatprep.subr.bf16.mxu0 0
    %376 = vmatpush1.bf16.msra.mxu0 0
    %377 = vmatprep.subr.bf16.mxu0 0
    %378 = vmatpush1.bf16.msra.mxu0 0
    %379 = vmatprep.mubr.bf16.mxu0 0
    %380 = vmatmul.mubr.bf16.gmra.mrb[0].mxu0 %v226
    %v381 = vpop.f32.mrb[0].mxu0
    %v382 = vadd.f32 0.0, %v381
    %v383 = vpop.f32.mrb[0].mxu0
    %v384 = vpop.f32.mrb[0].mxu0
    %v385 = vadd.f32 0.0, %v384
    %v386 = vpop.f32.mrb[0].mxu0
    %387 = vmatprep.mubr.bf16.mxu0 0
    %388 = vmatmul.mubr.bf16.gmra.mrb[0].mxu0 %v227
    %v389 = vpop.f32.mrb[0].mxu0
    %v390 = vadd.f32 0.0, %v389
    %v391 = vpop.f32.mrb[0].mxu0
    %v392 = vpop.f32.mrb[0].mxu0
    %v393 = vadd.f32 0.0, %v392
    %v394 = vpop.f32.mrb[0].mxu0
    %395 = vmatprep.mubr.bf16.mxu0 0
    %396 = vmatmul.mubr.bf16.gmra.mrb[0].mxu0 %v228
    %v397 = vpop.f32.mrb[0].mxu0
    %v398 = vadd.f32 0.0, %v397
    %v399 = vpop.f32.mrb[0].mxu0
    %v400 = vpop.f32.mrb[0].mxu0
    %v401 = vadd.f32 0.0, %v400
    %v402 = vpop.f32.mrb[0].mxu0
    %403 = vmatprep.mubr.bf16.mxu0 0
    %404 = vmatmul.mubr.bf16.gmra.mrb[0].mxu0 %v229
    %v405 = vpop.f32.mrb[0].mxu0
    %v406 = vadd.f32 0.0, %v405
    %v407 = vpop.f32.mrb[0].mxu0
    %v408 = vpop.f32.mrb[0].mxu0
    %v409 = vadd.f32 0.0, %v408
    %v410 = vpop.f32.mrb[0].mxu0
    %411 = vmatprep.mubr.bf16.mxu0 0
    %412 = vmatmul.mubr.bf16.gmra.mrb[0].mxu0 %v230
    %v413 = vpop.f32.mrb[0].mxu0
    %v414 = vadd.f32 0.0, %v413
    %v415 = vpop.f32.mrb[0].mxu0
    %v416 = vpop.f32.mrb[0].mxu0
    %v417 = vadd.f32 0.0, %v416
    %v418 = vpop.f32.mrb[0].mxu0
    %419 = vmatprep.mubr.bf16.mxu0 0
    %420 = vmatmul.mubr.bf16.gmra.mrb[0].mxu0 %v231
    %v421 = vpop.f32.mrb[0].mxu0
    %v422 = vadd.f32 0.0, %v421
    %v423 = vpop.f32.mrb[0].mxu0
    %v424 = vpop.f32.mrb[0].mxu0
    %v425 = vadd.f32 0.0, %v424
    %v426 = vpop.f32.mrb[0].mxu0
    %427 = vmatprep.mubr.bf16.mxu0 0
    %428 = vmatmul.mubr.bf16.gmra.mrb[0].mxu0 %v232
    %v429 = vpop.f32.mrb[0].mxu0
    %v430 = vadd.f32 0.0, %v429
    %v431 = vpop.f32.mrb[0].mxu0
    %v432 = vpop.f32.mrb[0].mxu0
    %v433 = vadd.f32 0.0, %v432
    %v434 = vpop.f32.mrb[0].mxu0
    %435 = vmatprep.mubr.bf16.mxu0 0
    %436 = vmatmul.mubr.bf16.gmra.mrb[0].mxu0 %v233
    %v437 = vpop.f32.mrb[0].mxu0
    %v438 = vadd.f32 0.0, %v437
    %v439 = vpop.f32.mrb[0].mxu0
    %v440 = vpop.f32.mrb[0].mxu0
    %v441 = vadd.f32 0.0, %v440
    %v442 = vpop.f32.mrb[0].mxu0
    %443 = vdwg.mxu0
    %v444 = vpack.c.bf16 %v385, %v382
    %v445 = vpack.c.bf16 %v393, %v390
    %v446 = vpack.c.bf16 %v401, %v398
    %v447 = vpack.c.bf16 %v409, %v406
    %v448 = vpack.c.bf16 %v417, %v414
    %v449 = vpack.c.bf16 %v425, %v422
    %v450 = vpack.c.bf16 %v433, %v430
    %v451 = vpack.c.bf16 %v441, %v438
    %v452 = vld [vmem:[%s3] sm:$0xf]
    %v453 = vld [vmem:[%s3 + $0x4] sm:$0xf]
    %v454 = vld [vmem:[%s3 + $0x8] sm:$0xf]
    %v455 = vld [vmem:[%s3 + $0xc] sm:$0xf]
    %v456 = vld [vmem:[%s3 + $0x10] sm:$0xf]
    %v457 = vld [vmem:[%s3 + $0x14] sm:$0xf]
    %v458 = vld [vmem:[%s3 + $0x18] sm:$0xf]
    %v459 = vld [vmem:[%s3 + $0x1c] sm:$0xf]
    %v460 = vld [vmem:[%s3 + $0x20] sm:$0xf]
    %v461 = vld [vmem:[%s3 + $0x24] sm:$0xf]
    %v462 = vld [vmem:[%s3 + $0x28] sm:$0xf]
    %v463 = vld [vmem:[%s3 + $0x2c] sm:$0xf]
    %v464 = vld [vmem:[%s3 + $0x30] sm:$0xf]
    %v465 = vld [vmem:[%s3 + $0x34] sm:$0xf]
    %v466 = vld [vmem:[%s3 + $0x38] sm:$0xf]
    %v467 = vld [vmem:[%s3 + $0x3c] sm:$0xf]
    %v468 = vld [vmem:[%s4] sm:$0xf]
    %v469 = vld [vmem:[%s4 + $0x4] sm:$0xf]
    %v470 = vld [vmem:[%s4 + $0x8] sm:$0xf]
    %v471 = vld [vmem:[%s4 + $0xc] sm:$0xf]
    %v472 = vld [vmem:[%s4 + $0x10] sm:$0xf]
    %v473 = vld [vmem:[%s4 + $0x14] sm:$0xf]
    %v474 = vld [vmem:[%s4 + $0x18] sm:$0xf]
    %v475 = vld [vmem:[%s4 + $0x1c] sm:$0xf]
    %v476 = vld [vmem:[%s4 + $0x20] sm:$0xf]
    %v477 = vld [vmem:[%s4 + $0x24] sm:$0xf]
    %v478 = vld [vmem:[%s4 + $0x28] sm:$0xf]
    %v479 = vld [vmem:[%s4 + $0x2c] sm:$0xf]
    %v480 = vld [vmem:[%s4 + $0x30] sm:$0xf]
    %v481 = vld [vmem:[%s4 + $0x34] sm:$0xf]
    %v482 = vld [vmem:[%s4 + $0x38] sm:$0xf]
    %v483 = vld [vmem:[%s4 + $0x3c] sm:$0xf]
    %v500 = vunpack.c.l.b16 %v468
    %v501 = vunpack.c.l.b16 %v469
    %v502 = vunpack.c.l.b16 %v470
    %v503 = vunpack.c.l.b16 %v471
    %v504 = vunpack.c.l.b16 %v472
    %v505 = vunpack.c.l.b16 %v473
    %v506 = vunpack.c.l.b16 %v474
    %v507 = vunpack.c.l.b16 %v475
    %v508 = vunpack.c.l.b16 %v476
    %v509 = vunpack.c.l.b16 %v477
    %v510 = vunpack.c.l.b16 %v478
    %v511 = vunpack.c.l.b16 %v479
    %v512 = vunpack.c.l.b16 %v480
    %v513 = vunpack.c.l.b16 %v481
    %v514 = vunpack.c.l.b16 %v482
    %v515 = vunpack.c.l.b16 %v483
    %v516 = vpack.c.b16 %v501, %v500
    %v517 = vpack.c.b16 %v503, %v502
    %v518 = vpack.c.b16 %v505, %v504
    %v519 = vpack.c.b16 %v507, %v506
    %v520 = vpack.c.b16 %v509, %v508
    %v521 = vpack.c.b16 %v511, %v510
    %v522 = vpack.c.b16 %v513, %v512
    %v523 = vpack.c.b16 %v515, %v514
    %532 = vmatprep.subr.bf16.mxu0 0
    %533 = vmatpush1.bf16.msra.mxu0 %v444
    %534 = vmatprep.subr.bf16.mxu0 0
    %535 = vmatpush1.bf16.msra.mxu0 %v445
    %536 = vmatprep.subr.bf16.mxu0 0
    %537 = vmatpush1.bf16.msra.mxu0 %v446
    %538 = vmatprep.subr.bf16.mxu0 0
    %539 = vmatpush1.bf16.msra.mxu0 %v447
    %540 = vmatprep.subr.bf16.mxu0 0
    %541 = vmatpush1.bf16.msra.mxu0 %v448
    %542 = vmatprep.subr.bf16.mxu0 0
    %543 = vmatpush1.bf16.msra.mxu0 %v449
    %544 = vmatprep.subr.bf16.mxu0 0
    %545 = vmatpush1.bf16.msra.mxu0 %v450
    %546 = vmatprep.subr.bf16.mxu0 0
    %547 = vmatpush1.bf16.msra.mxu0 %v451
    %548 = vmatprep.subr.bf16.mxu0 0
    %549 = vmatpush1.bf16.msra.mxu0 0
    %550 = vmatprep.subr.bf16.mxu0 0
    %551 = vmatpush1.bf16.msra.mxu0 0
    %552 = vmatprep.subr.bf16.mxu0 0
    %553 = vmatpush1.bf16.msra.mxu0 0
    %554 = vmatprep.subr.bf16.mxu0 0
    %555 = vmatpush1.bf16.msra.mxu0 0
    %556 = vmatprep.subr.bf16.mxu0 0
    %557 = vmatpush1.bf16.msra.mxu0 0
    %558 = vmatprep.subr.bf16.mxu0 0
    %559 = vmatpush1.bf16.msra.mxu0 0
    %560 = vmatprep.subr.bf16.mxu0 0
    %561 = vmatpush1.bf16.msra.mxu0 0
    %562 = vmatprep.subr.bf16.mxu0 0
    %563 = vmatpush1.bf16.msra.mxu0 0
    %564 = vmatprep.mubr.bf16.mxu0 0
    %565 = vmatmul.mubr.bf16.gmra.mrb[0].mxu0 %v516
    %v566 = vpop.f32.mrb[0].mxu0
    %v567 = vadd.f32 0.0, %v566
    %v568 = vpop.f32.mrb[0].mxu0
    %v569 = vpop.f32.mrb[0].mxu0
    %v570 = vadd.f32 0.0, %v569
    %v571 = vpop.f32.mrb[0].mxu0
    %572 = vmatprep.mubr.bf16.mxu0 0
    %573 = vmatmul.mubr.bf16.gmra.mrb[0].mxu0 %v517
    %v574 = vpop.f32.mrb[0].mxu0
    %v575 = vadd.f32 0.0, %v574
    %v576 = vpop.f32.mrb[0].mxu0
    %v577 = vpop.f32.mrb[0].mxu0
    %v578 = vadd.f32 0.0, %v577
    %v579 = vpop.f32.mrb[0].mxu0
    %580 = vmatprep.mubr.bf16.mxu0 0
    %581 = vmatmul.mubr.bf16.gmra.mrb[0].mxu0 %v518
    %v582 = vpop.f32.mrb[0].mxu0
    %v583 = vadd.f32 0.0, %v582
    %v584 = vpop.f32.mrb[0].mxu0
    %v585 = vpop.f32.mrb[0].mxu0
    %v586 = vadd.f32 0.0, %v585
    %v587 = vpop.f32.mrb[0].mxu0
    %588 = vmatprep.mubr.bf16.mxu0 0
    %589 = vmatmul.mubr.bf16.gmra.mrb[0].mxu0 %v519
    %v590 = vpop.f32.mrb[0].mxu0
    %v591 = vadd.f32 0.0, %v590
    %v592 = vpop.f32.mrb[0].mxu0
    %v593 = vpop.f32.mrb[0].mxu0
    %v594 = vadd.f32 0.0, %v593
    %v595 = vpop.f32.mrb[0].mxu0
    %596 = vmatprep.mubr.bf16.mxu0 0
    %597 = vmatmul.mubr.bf16.gmra.mrb[0].mxu0 %v520
    %v598 = vpop.f32.mrb[0].mxu0
    %v599 = vadd.f32 0.0, %v598
    %v600 = vpop.f32.mrb[0].mxu0
    %v601 = vpop.f32.mrb[0].mxu0
    %v602 = vadd.f32 0.0, %v601
    %v603 = vpop.f32.mrb[0].mxu0
    %604 = vmatprep.mubr.bf16.mxu0 0
    %605 = vmatmul.mubr.bf16.gmra.mrb[0].mxu0 %v521
    %v606 = vpop.f32.mrb[0].mxu0
    %v607 = vadd.f32 0.0, %v606
    %v608 = vpop.f32.mrb[0].mxu0
    %v609 = vpop.f32.mrb[0].mxu0
    %v610 = vadd.f32 0.0, %v609
    %v611 = vpop.f32.mrb[0].mxu0
    %612 = vmatprep.mubr.bf16.mxu0 0
    %613 = vmatmul.mubr.bf16.gmra.mrb[0].mxu0 %v522
    %v614 = vpop.f32.mrb[0].mxu0
    %v615 = vadd.f32 0.0, %v614
    %v616 = vpop.f32.mrb[0].mxu0
    %v617 = vpop.f32.mrb[0].mxu0
    %v618 = vadd.f32 0.0, %v617
    %v619 = vpop.f32.mrb[0].mxu0
    %620 = vmatprep.mubr.bf16.mxu0 0
    %621 = vmatmul.mubr.bf16.gmra.mrb[0].mxu0 %v523
    %v622 = vpop.f32.mrb[0].mxu0
    %v623 = vadd.f32 0.0, %v622
    %v624 = vpop.f32.mrb[0].mxu0
    %v625 = vpop.f32.mrb[0].mxu0
    %v626 = vadd.f32 0.0, %v625
    %v627 = vpop.f32.mrb[0].mxu0
    %628 = vdwg.mxu0
    %v645 = vunpack.c.l.b16 %v452
    %v646 = vunpack.c.l.b16 %v453
    %v647 = vunpack.c.l.b16 %v454
    %v648 = vunpack.c.l.b16 %v455
    %v649 = vunpack.c.l.b16 %v456
    %v650 = vunpack.c.l.b16 %v457
    %v651 = vunpack.c.l.b16 %v458
    %v652 = vunpack.c.l.b16 %v459
    %v653 = vunpack.c.l.b16 %v460
    %v654 = vunpack.c.l.b16 %v461
    %v655 = vunpack.c.l.b16 %v462
    %v656 = vunpack.c.l.b16 %v463
    %v657 = vunpack.c.l.b16 %v464
    %v658 = vunpack.c.l.b16 %v465
    %v659 = vunpack.c.l.b16 %v466
    %v660 = vunpack.c.l.b16 %v467
    %v661 = vpack.c.b16 %v646, %v645
    %v662 = vpack.c.b16 %v648, %v647
    %v663 = vpack.c.b16 %v650, %v649
    %v664 = vpack.c.b16 %v652, %v651
    %v665 = vpack.c.b16 %v654, %v653
    %v666 = vpack.c.b16 %v656, %v655
    %v667 = vpack.c.b16 %v658, %v657
    %v668 = vpack.c.b16 %v660, %v659
    %677 = vmatprep.subr.bf16.mxu0 0
    %678 = vmatpush1.bf16.msra.mxu0 %v339
    %679 = vmatprep.subr.bf16.mxu0 0
    %680 = vmatpush1.bf16.msra.mxu0 %v340
    %681 = vmatprep.subr.bf16.mxu0 0
    %682 = vmatpush1.bf16.msra.mxu0 %v341
    %683 = vmatprep.subr.bf16.mxu0 0
    %684 = vmatpush1.bf16.msra.mxu0 %v342
    %685 = vmatprep.subr.bf16.mxu0 0
    %686 = vmatpush1.bf16.msra.mxu0 %v343
    %687 = vmatprep.subr.bf16.mxu0 0
    %688 = vmatpush1.bf16.msra.mxu0 %v344
    %689 = vmatprep.subr.bf16.mxu0 0
    %690 = vmatpush1.bf16.msra.mxu0 %v345
    %691 = vmatprep.subr.bf16.mxu0 0
    %692 = vmatpush1.bf16.msra.mxu0 %v346
    %693 = vmatprep.subr.bf16.mxu0 0
    %694 = vmatpush1.bf16.msra.mxu0 0
    %695 = vmatprep.subr.bf16.mxu0 0
    %696 = vmatpush1.bf16.msra.mxu0 0
    %697 = vmatprep.subr.bf16.mxu0 0
    %698 = vmatpush1.bf16.msra.mxu0 0
    %699 = vmatprep.subr.bf16.mxu0 0
    %700 = vmatpush1.bf16.msra.mxu0 0
    %701 = vmatprep.subr.bf16.mxu0 0
    %702 = vmatpush1.bf16.msra.mxu0 0
    %703 = vmatprep.subr.bf16.mxu0 0
    %704 = vmatpush1.bf16.msra.mxu0 0
    %705 = vmatprep.subr.bf16.mxu0 0
    %706 = vmatpush1.bf16.msra.mxu0 0
    %707 = vmatprep.subr.bf16.mxu0 0
    %708 = vmatpush1.bf16.msra.mxu0 0
    %709 = vmatprep.mubr.bf16.mxu0 0
    %710 = vmatmul.mubr.bf16.gmra.mrb[0].mxu0 %v661
    %v711 = vpop.f32.mrb[0].mxu0
    %v712 = vadd.f32 %v567, %v711
    %v713 = vpop.f32.mrb[0].mxu0
    %v714 = vpop.f32.mrb[0].mxu0
    %v715 = vadd.f32 %v570, %v714
    %v716 = vpop.f32.mrb[0].mxu0
    %717 = vmatprep.mubr.bf16.mxu0 0
    %718 = vmatmul.mubr.bf16.gmra.mrb[0].mxu0 %v662
    %v719 = vpop.f32.mrb[0].mxu0
    %v720 = vadd.f32 %v575, %v719
    %v721 = vpop.f32.mrb[0].mxu0
    %v722 = vpop.f32.mrb[0].mxu0
    %v723 = vadd.f32 %v578, %v722
    %v724 = vpop.f32.mrb[0].mxu0
    %725 = vmatprep.mubr.bf16.mxu0 0
    %726 = vmatmul.mubr.bf16.gmra.mrb[0].mxu0 %v663
    %v727 = vpop.f32.mrb[0].mxu0
    %v728 = vadd.f32 %v583, %v727
    %v729 = vpop.f32.mrb[0].mxu0
    %v730 = vpop.f32.mrb[0].mxu0
    %v731 = vadd.f32 %v586, %v730
    %v732 = vpop.f32.mrb[0].mxu0
    %733 = vmatprep.mubr.bf16.mxu0 0
    %734 = vmatmul.mubr.bf16.gmra.mrb[0].mxu0 %v664
    %v735 = vpop.f32.mrb[0].mxu0
    %v736 = vadd.f32 %v591, %v735
    %v737 = vpop.f32.mrb[0].mxu0
    %v738 = vpop.f32.mrb[0].mxu0
    %v739 = vadd.f32 %v594, %v738
    %v740 = vpop.f32.mrb[0].mxu0
    %741 = vmatprep.mubr.bf16.mxu0 0
    %742 = vmatmul.mubr.bf16.gmra.mrb[0].mxu0 %v665
    %v743 = vpop.f32.mrb[0].mxu0
    %v744 = vadd.f32 %v599, %v743
    %v745 = vpop.f32.mrb[0].mxu0
    %v746 = vpop.f32.mrb[0].mxu0
    %v747 = vadd.f32 %v602, %v746
    %v748 = vpop.f32.mrb[0].mxu0
    %749 = vmatprep.mubr.bf16.mxu0 0
    %750 = vmatmul.mubr.bf16.gmra.mrb[0].mxu0 %v666
    %v751 = vpop.f32.mrb[0].mxu0
    %v752 = vadd.f32 %v607, %v751
    %v753 = vpop.f32.mrb[0].mxu0
    %v754 = vpop.f32.mrb[0].mxu0
    %v755 = vadd.f32 %v610, %v754
    %v756 = vpop.f32.mrb[0].mxu0
    %757 = vmatprep.mubr.bf16.mxu0 0
    %758 = vmatmul.mubr.bf16.gmra.mrb[0].mxu0 %v667
    %v759 = vpop.f32.mrb[0].mxu0
    %v760 = vadd.f32 %v615, %v759
    %v761 = vpop.f32.mrb[0].mxu0
    %v762 = vpop.f32.mrb[0].mxu0
    %v763 = vadd.f32 %v618, %v762
    %v764 = vpop.f32.mrb[0].mxu0
    %765 = vmatprep.mubr.bf16.mxu0 0
    %766 = vmatmul.mubr.bf16.gmra.mrb[0].mxu0 %v668
    %v767 = vpop.f32.mrb[0].mxu0
    %v768 = vadd.f32 %v623, %v767
    %v769 = vpop.f32.mrb[0].mxu0
    %v770 = vpop.f32.mrb[0].mxu0
    %v771 = vadd.f32 %v626, %v770
    %v772 = vpop.f32.mrb[0].mxu0
    %773 = vdwg.mxu0
    %v774 = vld [vmem:[%s5] sm:$0xff]
    %v775 = vld [vmem:[%s5 + $0x8] sm:$0xff]
    %v776 = vld [vmem:[%s5 + $0x10] sm:$0xff]
    %v777 = vld [vmem:[%s5 + $0x18] sm:$0xff]
    %v778 = vld [vmem:[%s5 + $0x20] sm:$0xff]
    %v779 = vld [vmem:[%s5 + $0x28] sm:$0xff]
    %v780 = vld [vmem:[%s5 + $0x30] sm:$0xff]
    %v781 = vld [vmem:[%s5 + $0x38] sm:$0xff]
    %v782 = vld [vmem:[%s5 + $0x40] sm:$0xff]
    %v783 = vld [vmem:[%s5 + $0x48] sm:$0xff]
    %v784 = vld [vmem:[%s5 + $0x50] sm:$0xff]
    %v785 = vld [vmem:[%s5 + $0x58] sm:$0xff]
    %v786 = vld [vmem:[%s5 + $0x60] sm:$0xff]
    %v787 = vld [vmem:[%s5 + $0x68] sm:$0xff]
    %v788 = vld [vmem:[%s5 + $0x70] sm:$0xff]
    %v789 = vld [vmem:[%s5 + $0x78] sm:$0xff]
    %791 = vset.pattern.permute.xlu0 0
    %792 = vperm.xlu0 %791, %v774
    %v793 = vpop.permute.xlu0 %792
    %796 = vset.pattern.permute.xlu0 0
    %797 = vperm.xlu0 %796, %v775
    %v798 = vpop.permute.xlu0 %797
    %801 = vset.pattern.permute.xlu0 0
    %802 = vperm.xlu0 %801, %v776
    %v803 = vpop.permute.xlu0 %802
    %806 = vset.pattern.permute.xlu0 0
    %807 = vperm.xlu0 %806, %v777
    %v808 = vpop.permute.xlu0 %807
    %811 = vset.pattern.permute.xlu0 0
    %812 = vperm.xlu0 %811, %v778
    %v813 = vpop.permute.xlu0 %812
    %816 = vset.pattern.permute.xlu0 0
    %817 = vperm.xlu0 %816, %v779
    %v818 = vpop.permute.xlu0 %817
    %821 = vset.pattern.permute.xlu0 0
    %822 = vperm.xlu0 %821, %v780
    %v823 = vpop.permute.xlu0 %822
    %826 = vset.pattern.permute.xlu0 0
    %827 = vperm.xlu0 %826, %v781
    %v828 = vpop.permute.xlu0 %827
    %831 = vset.pattern.permute.xlu0 0
    %832 = vperm.xlu0 %831, %v782
    %v833 = vpop.permute.xlu0 %832
    %836 = vset.pattern.permute.xlu0 0
    %837 = vperm.xlu0 %836, %v783
    %v838 = vpop.permute.xlu0 %837
    %841 = vset.pattern.permute.xlu0 0
    %842 = vperm.xlu0 %841, %v784
    %v843 = vpop.permute.xlu0 %842
    %846 = vset.pattern.permute.xlu0 0
    %847 = vperm.xlu0 %846, %v785
    %v848 = vpop.permute.xlu0 %847
    %851 = vset.pattern.permute.xlu0 0
    %852 = vperm.xlu0 %851, %v786
    %v853 = vpop.permute.xlu0 %852
    %856 = vset.pattern.permute.xlu0 0
    %857 = vperm.xlu0 %856, %v787
    %v858 = vpop.permute.xlu0 %857
    %861 = vset.pattern.permute.xlu0 0
    %862 = vperm.xlu0 %861, %v788
    %v863 = vpop.permute.xlu0 %862
    %866 = vset.pattern.permute.xlu0 0
    %867 = vperm.xlu0 %866, %v789
    %v868 = vpop.permute.xlu0 %867
    %v870 = vadd.f32 %v712, %v793
    %v871 = vadd.f32 %v715, %v798
    %v872 = vadd.f32 %v720, %v803
    %v873 = vadd.f32 %v723, %v808
    %v874 = vadd.f32 %v728, %v813
    %v875 = vadd.f32 %v731, %v818
    %v876 = vadd.f32 %v736, %v823
    %v877 = vadd.f32 %v739, %v828
    %v878 = vadd.f32 %v744, %v833
    %v879 = vadd.f32 %v747, %v838
    %v880 = vadd.f32 %v752, %v843
    %v881 = vadd.f32 %v755, %v848
    %v882 = vadd.f32 %v760, %v853
    %v883 = vadd.f32 %v763, %v858
    %v884 = vadd.f32 %v768, %v863
    %v885 = vadd.f32 %v771, %v868
    %v886 = vmax.f32 %v870, 0.0
    %v887 = vmax.f32 %v871, 0.0
    %v888 = vmax.f32 %v872, 0.0
    %v889 = vmax.f32 %v873, 0.0
    %v890 = vmax.f32 %v874, 0.0
    %v891 = vmax.f32 %v875, 0.0
    %v892 = vmax.f32 %v876, 0.0
    %v893 = vmax.f32 %v877, 0.0
    %v894 = vmax.f32 %v878, 0.0
    %v895 = vmax.f32 %v879, 0.0
    %v896 = vmax.f32 %v880, 0.0
    %v897 = vmax.f32 %v881, 0.0
    %v898 = vmax.f32 %v882, 0.0
    %v899 = vmax.f32 %v883, 0.0
    %v900 = vmax.f32 %v884, 0.0
    %v901 = vmax.f32 %v885, 0.0
    %v902 = vld [vmem:[%s6] sm:$0xf]
    %v903 = vld [vmem:[%s6 + $0x4] sm:$0xf]
    %v904 = vld [vmem:[%s6 + $0x8] sm:$0xf]
    %v905 = vld [vmem:[%s6 + $0xc] sm:$0xf]
    %v906 = vld [vmem:[%s6 + $0x10] sm:$0xf]
    %v907 = vld [vmem:[%s6 + $0x14] sm:$0xf]
    %v908 = vld [vmem:[%s6 + $0x18] sm:$0xf]
    %v909 = vld [vmem:[%s6 + $0x1c] sm:$0xf]
    %v910 = vld [vmem:[%s6 + $0x20] sm:$0xf]
    %v911 = vld [vmem:[%s6 + $0x24] sm:$0xf]
    %v912 = vld [vmem:[%s6 + $0x28] sm:$0xf]
    %v913 = vld [vmem:[%s6 + $0x2c] sm:$0xf]
    %v914 = vld [vmem:[%s6 + $0x30] sm:$0xf]
    %v915 = vld [vmem:[%s6 + $0x34] sm:$0xf]
    %v916 = vld [vmem:[%s6 + $0x38] sm:$0xf]
    %v917 = vld [vmem:[%s6 + $0x3c] sm:$0xf]
    %v918 = vpack.c.bf16 %v887, %v886
    %v919 = vpack.c.bf16 %v889, %v888
    %v920 = vpack.c.bf16 %v891, %v890
    %v921 = vpack.c.bf16 %v893, %v892
    %v922 = vpack.c.bf16 %v895, %v894
    %v923 = vpack.c.bf16 %v897, %v896
    %v924 = vpack.c.bf16 %v899, %v898
    %v925 = vpack.c.bf16 %v901, %v900
    %v926 = vld [vmem:[%s7] sm:$0xff]
    %v927 = vld [vmem:[%s7 + $0x8] sm:$0xff]
    %v928 = vld [vmem:[%s7 + $0x10] sm:$0xff]
    %v929 = vld [vmem:[%s7 + $0x18] sm:$0xff]
    %v930 = vld [vmem:[%s7 + $0x20] sm:$0xff]
    %v931 = vld [vmem:[%s7 + $0x28] sm:$0xff]
    %v932 = vld [vmem:[%s7 + $0x30] sm:$0xff]
    %v933 = vld [vmem:[%s7 + $0x38] sm:$0xff]
    %v934 = vld [vmem:[%s7 + $0x40] sm:$0xff]
    %v935 = vld [vmem:[%s7 + $0x48] sm:$0xff]
    %v936 = vld [vmem:[%s7 + $0x50] sm:$0xff]
    %v937 = vld [vmem:[%s7 + $0x58] sm:$0xff]
    %v938 = vld [vmem:[%s7 + $0x60] sm:$0xff]
    %v939 = vld [vmem:[%s7 + $0x68] sm:$0xff]
    %v940 = vld [vmem:[%s7 + $0x70] sm:$0xff]
    %v941 = vld [vmem:[%s7 + $0x78] sm:$0xff]
    %943 = vset.pattern.permute.xlu0 0
    %944 = vperm.xlu0 %943, %v926
    %v945 = vpop.permute.xlu0 %944
    %948 = vset.pattern.permute.xlu0 0
    %949 = vperm.xlu0 %948, %v927
    %v950 = vpop.permute.xlu0 %949
    %953 = vset.pattern.permute.xlu0 0
    %954 = vperm.xlu0 %953, %v928
    %v955 = vpop.permute.xlu0 %954
    %958 = vset.pattern.permute.xlu0 0
    %959 = vperm.xlu0 %958, %v929
    %v960 = vpop.permute.xlu0 %959
    %963 = vset.pattern.permute.xlu0 0
    %964 = vperm.xlu0 %963, %v930
    %v965 = vpop.permute.xlu0 %964
    %968 = vset.pattern.permute.xlu0 0
    %969 = vperm.xlu0 %968, %v931
    %v970 = vpop.permute.xlu0 %969
    %973 = vset.pattern.permute.xlu0 0
    %974 = vperm.xlu0 %973, %v932
    %v975 = vpop.permute.xlu0 %974
    %978 = vset.pattern.permute.xlu0 0
    %979 = vperm.xlu0 %978, %v933
    %v980 = vpop.permute.xlu0 %979
    %983 = vset.pattern.permute.xlu0 0
    %984 = vperm.xlu0 %983, %v934
    %v985 = vpop.permute.xlu0 %984
    %988 = vset.pattern.permute.xlu0 0
    %989 = vperm.xlu0 %988, %v935
    %v990 = vpop.permute.xlu0 %989
    %993 = vset.pattern.permute.xlu0 0
    %994 = vperm.xlu0 %993, %v936
    %v995 = vpop.permute.xlu0 %994
    %998 = vset.pattern.permute.xlu0 0
    %999 = vperm.xlu0 %998, %v937
    %v1000 = vpop.permute.xlu0 %999
    %1003 = vset.pattern.permute.xlu0 0
    %1004 = vperm.xlu0 %1003, %v938
    %v1005 = vpop.permute.xlu0 %1004
    %1008 = vset.pattern.permute.xlu0 0
    %1009 = vperm.xlu0 %1008, %v939
    %v1010 = vpop.permute.xlu0 %1009
    %1013 = vset.pattern.permute.xlu0 0
    %1014 = vperm.xlu0 %1013, %v940
    %v1015 = vpop.permute.xlu0 %1014
    %1018 = vset.pattern.permute.xlu0 0
    %1019 = vperm.xlu0 %1018, %v941
    %v1020 = vpop.permute.xlu0 %1019
    %v1038 = vunpack.c.l.b16 %v902
    %v1039 = vunpack.c.l.b16 %v903
    %v1040 = vunpack.c.l.b16 %v904
    %v1041 = vunpack.c.l.b16 %v905
    %v1042 = vunpack.c.l.b16 %v906
    %v1043 = vunpack.c.l.b16 %v907
    %v1044 = vunpack.c.l.b16 %v908
    %v1045 = vunpack.c.l.b16 %v909
    %v1046 = vunpack.c.l.b16 %v910
    %v1047 = vunpack.c.l.b16 %v911
    %v1048 = vunpack.c.l.b16 %v912
    %v1049 = vunpack.c.l.b16 %v913
    %v1050 = vunpack.c.l.b16 %v914
    %v1051 = vunpack.c.l.b16 %v915
    %v1052 = vunpack.c.l.b16 %v916
    %v1053 = vunpack.c.l.b16 %v917
    %v1054 = vpack.c.b16 %v1039, %v1038
    %v1055 = vpack.c.b16 %v1041, %v1040
    %v1056 = vpack.c.b16 %v1043, %v1042
    %v1057 = vpack.c.b16 %v1045, %v1044
    %v1058 = vpack.c.b16 %v1047, %v1046
    %v1059 = vpack.c.b16 %v1049, %v1048
    %v1060 = vpack.c.b16 %v1051, %v1050
    %v1061 = vpack.c.b16 %v1053, %v1052
    %1070 = vmatprep.subr.bf16.mxu0 0
    %1071 = vmatpush1.bf16.msra.mxu0 %v918
    %1072 = vmatprep.subr.bf16.mxu0 0
    %1073 = vmatpush1.bf16.msra.mxu0 %v919
    %1074 = vmatprep.subr.bf16.mxu0 0
    %1075 = vmatpush1.bf16.msra.mxu0 %v920
    %1076 = vmatprep.subr.bf16.mxu0 0
    %1077 = vmatpush1.bf16.msra.mxu0 %v921
    %1078 = vmatprep.subr.bf16.mxu0 0
    %1079 = vmatpush1.bf16.msra.mxu0 %v922
    %1080 = vmatprep.subr.bf16.mxu0 0
    %1081 = vmatpush1.bf16.msra.mxu0 %v923
    %1082 = vmatprep.subr.bf16.mxu0 0
    %1083 = vmatpush1.bf16.msra.mxu0 %v924
    %1084 = vmatprep.subr.bf16.mxu0 0
    %1085 = vmatpush1.bf16.msra.mxu0 %v925
    %1086 = vmatprep.subr.bf16.mxu0 0
    %1087 = vmatpush1.bf16.msra.mxu0 0
    %1088 = vmatprep.subr.bf16.mxu0 0
    %1089 = vmatpush1.bf16.msra.mxu0 0
    %1090 = vmatprep.subr.bf16.mxu0 0
    %1091 = vmatpush1.bf16.msra.mxu0 0
    %1092 = vmatprep.subr.bf16.mxu0 0
    %1093 = vmatpush1.bf16.msra.mxu0 0
    %1094 = vmatprep.subr.bf16.mxu0 0
    %1095 = vmatpush1.bf16.msra.mxu0 0
    %1096 = vmatprep.subr.bf16.mxu0 0
    %1097 = vmatpush1.bf16.msra.mxu0 0
    %1098 = vmatprep.subr.bf16.mxu0 0
    %1099 = vmatpush1.bf16.msra.mxu0 0
    %1100 = vmatprep.subr.bf16.mxu0 0
    %1101 = vmatpush1.bf16.msra.mxu0 0
    %1102 = vmatprep.mubr.bf16.mxu0 0
    %1103 = vmatmul.mubr.bf16.gmra.mrb[0].mxu0 %v1054
    %v1104 = vpop.f32.mrb[0].mxu0
    %v1105 = vadd.f32 %v945, %v1104
    %v1106 = vpop.f32.mrb[0].mxu0
    %v1107 = vpop.f32.mrb[0].mxu0
    %v1108 = vadd.f32 %v950, %v1107
    %v1109 = vpop.f32.mrb[0].mxu0
    %1110 = vmatprep.mubr.bf16.mxu0 0
    %1111 = vmatmul.mubr.bf16.gmra.mrb[0].mxu0 %v1055
    %v1112 = vpop.f32.mrb[0].mxu0
    %v1113 = vadd.f32 %v955, %v1112
    %v1114 = vpop.f32.mrb[0].mxu0
    %v1115 = vpop.f32.mrb[0].mxu0
    %v1116 = vadd.f32 %v960, %v1115
    %v1117 = vpop.f32.mrb[0].mxu0
    %1118 = vmatprep.mubr.bf16.mxu0 0
    %1119 = vmatmul.mubr.bf16.gmra.mrb[0].mxu0 %v1056
    %v1120 = vpop.f32.mrb[0].mxu0
    %v1121 = vadd.f32 %v965, %v1120
    %v1122 = vpop.f32.mrb[0].mxu0
    %v1123 = vpop.f32.mrb[0].mxu0
    %v1124 = vadd.f32 %v970, %v1123
    %v1125 = vpop.f32.mrb[0].mxu0
    %1126 = vmatprep.mubr.bf16.mxu0 0
    %1127 = vmatmul.mubr.bf16.gmra.mrb[0].mxu0 %v1057
    %v1128 = vpop.f32.mrb[0].mxu0
    %v1129 = vadd.f32 %v975, %v1128
    %v1130 = vpop.f32.mrb[0].mxu0
    %v1131 = vpop.f32.mrb[0].mxu0
    %v1132 = vadd.f32 %v980, %v1131
    %v1133 = vpop.f32.mrb[0].mxu0
    %1134 = vmatprep.mubr.bf16.mxu0 0
    %1135 = vmatmul.mubr.bf16.gmra.mrb[0].mxu0 %v1058
    %v1136 = vpop.f32.mrb[0].mxu0
    %v1137 = vadd.f32 %v985, %v1136
    %v1138 = vpop.f32.mrb[0].mxu0
    %v1139 = vpop.f32.mrb[0].mxu0
    %v1140 = vadd.f32 %v990, %v1139
    %v1141 = vpop.f32.mrb[0].mxu0
    %1142 = vmatprep.mubr.bf16.mxu0 0
    %1143 = vmatmul.mubr.bf16.gmra.mrb[0].mxu0 %v1059
    %v1144 = vpop.f32.mrb[0].mxu0
    %v1145 = vadd.f32 %v995, %v1144
    %v1146 = vpop.f32.mrb[0].mxu0
    %v1147 = vpop.f32.mrb[0].mxu0
    %v1148 = vadd.f32 %v1000, %v1147
    %v1149 = vpop.f32.mrb[0].mxu0
    %1150 = vmatprep.mubr.bf16.mxu0 0
    %1151 = vmatmul.mubr.bf16.gmra.mrb[0].mxu0 %v1060
    %v1152 = vpop.f32.mrb[0].mxu0
    %v1153 = vadd.f32 %v1005, %v1152
    %v1154 = vpop.f32.mrb[0].mxu0
    %v1155 = vpop.f32.mrb[0].mxu0
    %v1156 = vadd.f32 %v1010, %v1155
    %v1157 = vpop.f32.mrb[0].mxu0
    %1158 = vmatprep.mubr.bf16.mxu0 0
    %1159 = vmatmul.mubr.bf16.gmra.mrb[0].mxu0 %v1061
    %v1160 = vpop.f32.mrb[0].mxu0
    %v1161 = vadd.f32 %v1015, %v1160
    %v1162 = vpop.f32.mrb[0].mxu0
    %v1163 = vpop.f32.mrb[0].mxu0
    %v1164 = vadd.f32 %v1020, %v1163
    %v1165 = vpop.f32.mrb[0].mxu0
    %1166 = vdwg.mxu0
    %v1167 = vmax.f32 %v1105, 0.0
    %v1168 = vmax.f32 %v1108, 0.0
    %v1169 = vmax.f32 %v1113, 0.0
    %v1170 = vmax.f32 %v1116, 0.0
    %v1171 = vmax.f32 %v1121, 0.0
    %v1172 = vmax.f32 %v1124, 0.0
    %v1173 = vmax.f32 %v1129, 0.0
    %v1174 = vmax.f32 %v1132, 0.0
    %v1175 = vmax.f32 %v1137, 0.0
    %v1176 = vmax.f32 %v1140, 0.0
    %v1177 = vmax.f32 %v1145, 0.0
    %v1178 = vmax.f32 %v1148, 0.0
    %v1179 = vmax.f32 %v1153, 0.0
    %v1180 = vmax.f32 %v1156, 0.0
    %v1181 = vmax.f32 %v1161, 0.0
    %v1182 = vmax.f32 %v1164, 0.0
    %v1183 = vld [vmem:[%s8] sm:$0xff]
    %v1184 = vld [vmem:[%s8 + $0x8] sm:$0xff]
    %v1185 = vld [vmem:[%s8 + $0x10] sm:$0xff]
    %v1186 = vld [vmem:[%s8 + $0x18] sm:$0xff]
    %v1187 = vld [vmem:[%s8 + $0x20] sm:$0xff]
    %v1188 = vld [vmem:[%s8 + $0x28] sm:$0xff]
    %v1189 = vld [vmem:[%s8 + $0x30] sm:$0xff]
    %v1190 = vld [vmem:[%s8 + $0x38] sm:$0xff]
    %v1191 = vld [vmem:[%s8 + $0x40] sm:$0xff]
    %v1192 = vld [vmem:[%s8 + $0x48] sm:$0xff]
    %v1193 = vld [vmem:[%s8 + $0x50] sm:$0xff]
    %v1194 = vld [vmem:[%s8 + $0x58] sm:$0xff]
    %v1195 = vld [vmem:[%s8 + $0x60] sm:$0xff]
    %v1196 = vld [vmem:[%s8 + $0x68] sm:$0xff]
    %v1197 = vld [vmem:[%s8 + $0x70] sm:$0xff]
    %v1198 = vld [vmem:[%s8 + $0x78] sm:$0xff]
    %1200 = vset.pattern.permute.xlu0 0
    %1201 = vperm.xlu0 %1200, %v1183
    %v1202 = vpop.permute.xlu0 %1201
    %1205 = vset.pattern.permute.xlu0 0
    %1206 = vperm.xlu0 %1205, %v1184
    %v1207 = vpop.permute.xlu0 %1206
    %1210 = vset.pattern.permute.xlu0 0
    %1211 = vperm.xlu0 %1210, %v1185
    %v1212 = vpop.permute.xlu0 %1211
    %1215 = vset.pattern.permute.xlu0 0
    %1216 = vperm.xlu0 %1215, %v1186
    %v1217 = vpop.permute.xlu0 %1216
    %1220 = vset.pattern.permute.xlu0 0
    %1221 = vperm.xlu0 %1220, %v1187
    %v1222 = vpop.permute.xlu0 %1221
    %1225 = vset.pattern.permute.xlu0 0
    %1226 = vperm.xlu0 %1225, %v1188
    %v1227 = vpop.permute.xlu0 %1226
    %1230 = vset.pattern.permute.xlu0 0
    %1231 = vperm.xlu0 %1230, %v1189
    %v1232 = vpop.permute.xlu0 %1231
    %1235 = vset.pattern.permute.xlu0 0
    %1236 = vperm.xlu0 %1235, %v1190
    %v1237 = vpop.permute.xlu0 %1236
    %1240 = vset.pattern.permute.xlu0 0
    %1241 = vperm.xlu0 %1240, %v1191
    %v1242 = vpop.permute.xlu0 %1241
    %1245 = vset.pattern.permute.xlu0 0
    %1246 = vperm.xlu0 %1245, %v1192
    %v1247 = vpop.permute.xlu0 %1246
    %1250 = vset.pattern.permute.xlu0 0
    %1251 = vperm.xlu0 %1250, %v1193
    %v1252 = vpop.permute.xlu0 %1251
    %1255 = vset.pattern.permute.xlu0 0
    %1256 = vperm.xlu0 %1255, %v1194
    %v1257 = vpop.permute.xlu0 %1256
    %1260 = vset.pattern.permute.xlu0 0
    %1261 = vperm.xlu0 %1260, %v1195
    %v1262 = vpop.permute.xlu0 %1261
    %1265 = vset.pattern.permute.xlu0 0
    %1266 = vperm.xlu0 %1265, %v1196
    %v1267 = vpop.permute.xlu0 %1266
    %1270 = vset.pattern.permute.xlu0 0
    %1271 = vperm.xlu0 %1270, %v1197
    %v1272 = vpop.permute.xlu0 %1271
    %1275 = vset.pattern.permute.xlu0 0
    %1276 = vperm.xlu0 %1275, %v1198
    %v1277 = vpop.permute.xlu0 %1276
    %v1279 = vmul.f32 %v1167, %v1202
    %v1280 = vmul.f32 %v1168, %v1207
    %v1281 = vmul.f32 %v1169, %v1212
    %v1282 = vmul.f32 %v1170, %v1217
    %v1283 = vmul.f32 %v1171, %v1222
    %v1284 = vmul.f32 %v1172, %v1227
    %v1285 = vmul.f32 %v1173, %v1232
    %v1286 = vmul.f32 %v1174, %v1237
    %v1287 = vmul.f32 %v1175, %v1242
    %v1288 = vmul.f32 %v1176, %v1247
    %v1289 = vmul.f32 %v1177, %v1252
    %v1290 = vmul.f32 %v1178, %v1257
    %v1291 = vmul.f32 %v1179, %v1262
    %v1292 = vmul.f32 %v1180, %v1267
    %v1293 = vmul.f32 %v1181, %v1272
    %v1294 = vmul.f32 %v1182, %v1277
    %v1295 = vadd.f32 %v1279, %v1280
    %v1296 = vadd.f32 %v1295, %v1281
    %v1297 = vadd.f32 %v1296, %v1282
    %v1298 = vadd.f32 %v1297, %v1283
    %v1299 = vadd.f32 %v1298, %v1284
    %v1300 = vadd.f32 %v1299, %v1285
    %v1301 = vadd.f32 %v1300, %v1286
    %v1302 = vadd.f32 %v1301, %v1287
    %v1303 = vadd.f32 %v1302, %v1288
    %v1304 = vadd.f32 %v1303, %v1289
    %v1305 = vadd.f32 %v1304, %v1290
    %v1306 = vadd.f32 %v1305, %v1291
    %v1307 = vadd.f32 %v1306, %v1292
    %v1308 = vadd.f32 %v1307, %v1293
    %v1309 = vadd.f32 %v1308, %v1294
    %v1310 = vrot.slane %v1309, 4
    %v1311 = vadd.f32 %v1309, %v1310
    %v1312 = vrot.slane %v1311, 2
    %v1313 = vadd.f32 %v1311, %v1312
    %v1314 = vrot.slane %v1313, 1
    %v1315 = vadd.f32 %v1313, %v1314
    %v1316 = vld [vmem:[#allocation2] sm:$0x1]
    %1318 = vset.pattern.permute.xlu0 0
    %1319 = vperm.xlu0 %1318, %v1316
    %v1320 = vpop.permute.xlu0 %1319
    %v1322 = vlaneseq
    %v1323 = vshrl.u32 %v1322, 7
    %v1324 = vsub.s32 0, %v1323
    %v1325 = vrot.slane %v1320, %v1324
    %v1326 = vadd.f32 %v1315, %v1325
    %1327 = vst [vmem:[#allocation3] sm:$0x1] %v1326
    // Predicated region
    $region42: #{tpu_custom_call.1} parent=1 // pred_check
      _
    $region43: #{tpu_custom_call.1} parent=1 // pred_check_branch
      %1329 = sbr.rel (0) target = $region45
    $region44: #{tpu_custom_call.1} parent=1 // pred_region
      %s1331 = ssub.s32 16, 16
      %1332 = vsyncadd [#allocation4], %s1331
      %s1334 = sshll.u32 [#allocation3], 4
      %s1335 = int_to_ptr.vmem [resolvable:$true] %s1334
      %1337 = dma.vmem_to_hbm [thread:$0]  %s1335, 16, %s10, [#allocation4]
    $region45: #{tpu_custom_call.1} parent=1 // pred_fallthru
      _
    // Predicated region
    $region46: #{tpu_custom_call.1} parent=1 // pred_check
      _
    $region47: #{tpu_custom_call.1} parent=1 // pred_check_branch
      %1339 = sbr.rel (0) target = $region49
    $region48: #{tpu_custom_call.1} parent=1 // pred_region
      %1340 = dma.done [#allocation4], 16
    $region49: #{tpu_custom_call.1} parent=1 // pred_fallthru
      _
    %1341 = vsyncpa [#allocation4], 1

</llo_original>
